<compile_context>
chip_gen: v5e
topology: v5e:2x2
jax: 0.10.0
libtpu: 0.0.40
codegen_flags: <defaults>
</compile_context>

<pallas_src>
import jax
import jax.numpy as jnp
import numpy as np
from jax.experimental import pallas as pl
from jax.experimental.pallas import tpu as pltpu

HIDDEN = 128

# Per-grid-step batch tile.  Stacked matmul M = 16 * BATCH_TILE:
#   BATCH_TILE=8  -> M=128: fills a v5e 128x128 MXU pass, modest vreg pressure.
#   BATCH_TILE=16 -> M=256: fills v6e/v7x 256-wide MXU rows (more spill traffic).
BATCH_TILE = 8

# unique (i <= j) Hessian pair order, and the row-major scatter back to 4x4
_PAIRS = ((0, 0), (0, 1), (0, 2), (0, 3),
          (1, 1), (1, 2), (1, 3),
          (2, 2), (2, 3), (3, 3))
_FULL_IDX = np.array([0, 1, 2, 3,
                      1, 4, 5, 6,
                      2, 5, 7, 8,
                      3, 6, 8, 9], dtype=np.int32)


def lnn_kernel(x_ref, wt1_ref, wmid_ref, bias_ref, w5_ref, out_ref):
    """One batch tile: propagate value / Jacobian / unique-Hessian rows.

    Stack layout (groups of BATCH_TILE sublane rows, 16 groups total):
      [a | da/dx_0..3 | unique d2a/dx_i dx_j (10) | zero pad]
    """
    f32 = jnp.float32
    bt = x_ref.shape[0]

    # ---- layer 1: Linear(4, H) + Softplus.  d2z/dx2 == 0 exactly. -----------
    x = x_ref[...]                                        # (bt, 4)
    wt1 = wt1_ref[...]                                    # (4, H)
    z = jnp.dot(x, wt1, preferred_element_type=f32) + bias_ref[0:1, :]
    sp = jax.nn.sigmoid(z)                                # softplus'(z)
    spp = sp * (1.0 - sp)                                 # softplus''(z)
    a = jax.nn.softplus(z)
    # dz_n/dx_i = wt1[i, n] (independent of the batch element)
    j_rows = [sp * wt1[i:i + 1, :] for i in range(4)]
    h_rows = [spp * (wt1[i:i + 1, :] * wt1[j:j + 1, :]) for (i, j) in _PAIRS]
    pad = jnp.zeros_like(a)
    stack = jnp.concatenate([a] + j_rows + h_rows + [pad], axis=0)  # (16*bt, H)

    # ---- layers 2..4: ONE stacked (16*bt, H) @ (H, H) matmul per layer ------
    for l in range(3):
        out = jnp.dot(stack, wmid_ref[l], preferred_element_type=f32)
        z = out[0:bt] + bias_ref[l + 1:l + 2, :]
        jz = [out[(1 + i) * bt:(2 + i) * bt] for i in range(4)]
        hz = [out[(5 + k) * bt:(6 + k) * bt] for k in range(10)]
        sp = jax.nn.sigmoid(z)
        spp = sp * (1.0 - sp)
        a = jax.nn.softplus(z)
        j_rows = [sp * jz[i] for i in range(4)]
        h_rows = [spp * (jz[i] * jz[j]) + sp * hz[k]
                  for k, (i, j) in enumerate(_PAIRS)]
        stack = jnp.concatenate([a] + j_rows + h_rows + [pad], axis=0)

    # ---- layer 5: VPU multiply + lane reduce against w5 stored as (1, H) ----
    # rows (per group): [L - b5 | J_0..3 | unique H (10) | 0], column per row.
    out_ref[...] = jnp.sum(stack * w5_ref[...], axis=-1, keepdims=True)


def lnn_jac_hess_batch(xs, packed, batch_tile=BATCH_TILE):
    """Returns (L, J, H) for a batch of points xs: (B,), (B, 4), (B, 4, 4)."""
    wt1, wmid, bias, w5, b5 = packed
    hidden = wt1.shape[1]
    B = xs.shape[0]
    bt = batch_tile
    n_tiles = -(-B // bt)
    Bp = n_tiles * bt
    xpad = jnp.zeros((Bp, 4), jnp.float32).at[:B].set(xs.astype(jnp.float32))

    flat = pl.pallas_call(
        lnn_kernel,
        out_shape=jax.ShapeDtypeStruct((Bp * 16, 1), jnp.float32),
        grid_spec=pltpu.PrefetchScalarGridSpec(
            num_scalar_prefetch=0,
            grid=(n_tiles,),
            in_specs=[
                pl.BlockSpec((bt, 4), lambda i: (i, 0)),          # x tile streams
                pl.BlockSpec((4, hidden), lambda i: (0, 0)),      # weights stay
                pl.BlockSpec((3, hidden, hidden), lambda i: (0, 0, 0)),
                pl.BlockSpec((4, hidden), lambda i: (0, 0)),
                pl.BlockSpec((1, hidden), lambda i: (0, 0)),
            ],
            out_specs=pl.BlockSpec((16 * bt, 1), lambda i: (i, 0)),
        ),
        compiler_params=pltpu.CompilerParams(
            dimension_semantics=("parallel",)),   # v7x: split batch across TCs
    )(xpad, wt1, wmid, bias, w5)

    # per tile, rows are group-major: row = tile*16*bt + group*bt + elem
    vals = flat[:, 0].reshape(n_tiles, 16, bt)
    vals = jnp.transpose(vals, (0, 2, 1)).reshape(Bp, 16)[:B]     # (B, 16)
    L = vals[:, 0] + b5                      # restore the dropped final bias
    J = vals[:, 1:5]
    Hu = vals[:, 5:15]
    Hfull = Hu[:, jnp.asarray(_FULL_IDX)].reshape(B, 4, 4)        # symmetric
    return L, J, Hfull


@jax.jit
def lnn_forward(x, packed):
    """Matches LNN.forward for one x: pinv(H[2:,2:]) @ (J[:2] - H[2:,:2] @ x[2:])."""
    _, J, Hm = lnn_jac_hess_batch(x.reshape(1, 4), packed)
    J = J[0]
    Hm = Hm[0]
    A = J[:2]
    Bm = Hm[2:, 2:]
    C = Hm[2:, :2]
    rhs = A - C @ x[2:]
    # Closed-form 2x2 inverse (adjugate / det) instead of an SVD-based pinv.
    det = Bm[0, 0] * Bm[1, 1] - Bm[0, 1] * Bm[1, 0]
    # TODO(synk): exact pinv behaviour for (near-)singular B is not replicated;
    #             the guard just keeps the inverse finite (Tikhonov-like).
    safe_det = jnp.where(jnp.abs(det) > 1e-12, det,
                         jnp.where(det >= 0, 1e-12, -1e-12))
    inv = jnp.array([[Bm[1, 1], -Bm[0, 1]],
                     [-Bm[1, 0], Bm[0, 0]]]) / safe_det
    return inv @ rhs


def init_params(key, hidden=HIDDEN):
    """nn.Linear-style init (uniform +/- 1/sqrt(fan_in)), packed for the kernel."""
    dims = [(4, hidden), (hidden, hidden), (hidden, hidden), (hidden, hidden),
            (hidden, 1)]
    wts, bs = [], []
    for fan_in, fan_out in dims:
        key, k1, k2 = jax.random.split(key, 3)
        bound = 1.0 / float(np.sqrt(fan_in))
        wts.append(jax.random.uniform(k1, (fan_in, fan_out), jnp.float32,
                                      -bound, bound))
        bs.append(jax.random.uniform(k2, (fan_out,), jnp.float32, -bound, bound))
    wt1 = wts[0]                              # (4, H)
    wmid = jnp.stack(wts[1:4], axis=0)        # (3, H, H)
    bias = jnp.stack(bs[0:4], axis=0)         # (4, H)
    w5 = wts[4].T                             # (1, H) lane-dense row
    b5 = bs[4][0]                             # scalar
    return wt1, wmid, bias, w5, b5


# ---- pure-JAX reference (for correctness check only) -------------------------
def lagrangian_ref(packed, x):
    wt1, wmid, bias, w5, b5 = packed
    a = jax.nn.softplus(x @ wt1 + bias[0])
    for l in range(3):
        a = jax.nn.softplus(a @ wmid[l] + bias[l + 1])
    return a @ w5[0] + b5


if __name__ == "__main__":
    key = jax.random.PRNGKey(0)
    key, xkey, bkey = jax.random.split(key, 3)
    packed = init_params(key)
    x = jax.random.normal(xkey, (4,), jnp.float32)
    xs = jax.random.normal(bkey, (4, 4), jnp.float32)   # small batch of points

    # single-x forward, same semantics as the PyTorch module (returns (2,))
    out = lnn_forward(x, packed)
    out = jax.block_until_ready(out)
    assert out.shape == (2,)

    # sanity check: kernel's analytic L / J / H vs JAX autodiff of the reference
    L, J, Hm = jax.jit(lnn_jac_hess_batch)(xs, packed)
    jax.block_until_ready(Hm)
    f = lambda v: lagrangian_ref(packed, v)
    L_ref = jax.vmap(f)(xs)
    J_ref = jax.vmap(jax.jacobian(f))(xs)
    H_ref = jax.vmap(jax.hessian(f))(xs)
    np.testing.assert_allclose(np.asarray(L), np.asarray(L_ref), rtol=2e-2, atol=1e-4)
    np.testing.assert_allclose(np.asarray(J), np.asarray(J_ref), rtol=2e-2, atol=1e-4)
    np.testing.assert_allclose(np.asarray(Hm), np.asarray(H_ref), rtol=2e-2, atol=1e-4)

    print("KERNEL_OK")
</pallas_src>

<mosaic_0001>
module attributes {stable_mosaic.version = 11 : i64} {
  func.func @lnn_kernel(%arg0: i32, %arg1: memref<8x4xf32, #tpu.memory_space<vmem>>, %arg2: memref<4x128xf32, #tpu.memory_space<vmem>>, %arg3: memref<3x128x128xf32, #tpu.memory_space<vmem>>, %arg4: memref<4x128xf32, #tpu.memory_space<vmem>>, %arg5: memref<1x128xf32, #tpu.memory_space<vmem>>, %arg6: memref<128x1xf32, #tpu.memory_space<vmem>>) attributes {dimension_semantics = [#tpu.dimension_semantics<parallel>], iteration_bounds = array<i64: 1>, scalar_prefetch = 0 : i64, scratch_operands = 0 : i64, tpu.core_type = #tpu.core_type<tc>, window_params = [{transform_indices = @transform_0, window_bounds = array<i64: 8, 4>}, {pipeline_mode = #tpu.pipeline_mode<synchronous>, transform_indices = @transform_1, window_bounds = array<i64: 4, 128>}, {pipeline_mode = #tpu.pipeline_mode<synchronous>, transform_indices = @transform_2, window_bounds = array<i64: 3, 128, 128>}, {pipeline_mode = #tpu.pipeline_mode<synchronous>, transform_indices = @transform_3, window_bounds = array<i64: 4, 128>}, {pipeline_mode = #tpu.pipeline_mode<synchronous>, transform_indices = @transform_4, window_bounds = array<i64: 1, 128>}, {transform_indices = @transform_5, window_bounds = array<i64: 128, 1>}]} {
    %c0 = arith.constant 0 : index
    %c0_0 = arith.constant 0 : index
    %0 = vector.load %arg1[%c0, %c0_0] : memref<8x4xf32, #tpu.memory_space<vmem>>, vector<8x4xf32>
    %c0_1 = arith.constant 0 : index
    %c0_2 = arith.constant 0 : index
    %1 = vector.load %arg2[%c0_1, %c0_2] : memref<4x128xf32, #tpu.memory_space<vmem>>, vector<4x128xf32>
    %cst = arith.constant dense<0.000000e+00> : vector<8x128xf32>
    %2 = tpu.matmul %0, %1, %cst {dimension_numbers = #tpu.dot_dimension_numbers<[1], [0], [0], [1], [0, 0, 1, 1], [], []>} : vector<8x4xf32>, vector<4x128xf32>, vector<8x128xf32> -> vector<8x128xf32>
    %c0_3 = arith.constant 0 : index
    %c0_4 = arith.constant 0 : index
    %3 = vector.load %arg4[%c0_3, %c0_4] : memref<4x128xf32, #tpu.memory_space<vmem>>, vector<1x128xf32>
    %4 = vector.broadcast %3 : vector<1x128xf32> to vector<8x128xf32>
    %5 = arith.addf %2, %4 : vector<8x128xf32>
    %6 = arith.negf %5 : vector<8x128xf32>
    %7 = math.exp %6 : vector<8x128xf32>
    %cst_5 = arith.constant 1.000000e+00 : f32
    %8 = vector.broadcast %cst_5 : f32 to vector<8x128xf32>
    %9 = arith.addf %8, %7 : vector<8x128xf32>
    %10 = arith.divf %8, %9 : vector<8x128xf32>
    %cst_6 = arith.constant 1.000000e+00 : f32
    %11 = vector.broadcast %cst_6 : f32 to vector<8x128xf32>
    %12 = arith.subf %11, %10 : vector<8x128xf32>
    %13 = arith.mulf %10, %12 : vector<8x128xf32>
    %cst_7 = arith.constant 0.000000e+00 : f32
    %14 = vector.broadcast %cst_7 : f32 to vector<8x128xf32>
    %15 = arith.maximumf %5, %14 : vector<8x128xf32>
    %16 = vector.broadcast %cst_7 : f32 to vector<8x128xf32>
    %17 = arith.subf %5, %16 : vector<8x128xf32>
    %18 = arith.cmpf one, %17, %17 : vector<8x128xf32>
    %19 = vector.broadcast %cst_7 : f32 to vector<8x128xf32>
    %20 = arith.addf %5, %19 : vector<8x128xf32>
    %21 = math.absf %17 : vector<8x128xf32>
    %cst_8 = arith.constant 0.000000e+00 : f32
    %22 = vector.broadcast %cst_8 : f32 to vector<8x128xf32>
    %23 = arith.subf %22, %21 : vector<8x128xf32>
    %24 = math.exp %23 : vector<8x128xf32>
    %25 = math.log1p %24 : vector<8x128xf32>
    %26 = arith.addf %15, %25 : vector<8x128xf32>
    %27 = arith.select %18, %20, %26 : vector<8x128xi1>, vector<8x128xf32>
    %28 = vector.extract_strided_slice %1 {offsets = [0, 0], sizes = [1, 128], strides = [1, 1]} : vector<4x128xf32> to vector<1x128xf32>
    %29 = vector.broadcast %28 : vector<1x128xf32> to vector<8x128xf32>
    %30 = arith.mulf %10, %29 : vector<8x128xf32>
    %31 = vector.extract_strided_slice %1 {offsets = [1, 0], sizes = [1, 128], strides = [1, 1]} : vector<4x128xf32> to vector<1x128xf32>
    %32 = vector.broadcast %31 : vector<1x128xf32> to vector<8x128xf32>
    %33 = arith.mulf %10, %32 : vector<8x128xf32>
    %34 = vector.extract_strided_slice %1 {offsets = [2, 0], sizes = [1, 128], strides = [1, 1]} : vector<4x128xf32> to vector<1x128xf32>
    %35 = vector.broadcast %34 : vector<1x128xf32> to vector<8x128xf32>
    %36 = arith.mulf %10, %35 : vector<8x128xf32>
    %37 = vector.extract_strided_slice %1 {offsets = [3, 0], sizes = [1, 128], strides = [1, 1]} : vector<4x128xf32> to vector<1x128xf32>
    %38 = vector.broadcast %37 : vector<1x128xf32> to vector<8x128xf32>
    %39 = arith.mulf %10, %38 : vector<8x128xf32>
    %40 = vector.extract_strided_slice %1 {offsets = [0, 0], sizes = [1, 128], strides = [1, 1]} : vector<4x128xf32> to vector<1x128xf32>
    %41 = vector.extract_strided_slice %1 {offsets = [0, 0], sizes = [1, 128], strides = [1, 1]} : vector<4x128xf32> to vector<1x128xf32>
    %42 = arith.mulf %40, %41 : vector<1x128xf32>
    %43 = vector.broadcast %42 : vector<1x128xf32> to vector<8x128xf32>
    %44 = arith.mulf %13, %43 : vector<8x128xf32>
    %45 = vector.extract_strided_slice %1 {offsets = [0, 0], sizes = [1, 128], strides = [1, 1]} : vector<4x128xf32> to vector<1x128xf32>
    %46 = vector.extract_strided_slice %1 {offsets = [1, 0], sizes = [1, 128], strides = [1, 1]} : vector<4x128xf32> to vector<1x128xf32>
    %47 = arith.mulf %45, %46 : vector<1x128xf32>
    %48 = vector.broadcast %47 : vector<1x128xf32> to vector<8x128xf32>
    %49 = arith.mulf %13, %48 : vector<8x128xf32>
    %50 = vector.extract_strided_slice %1 {offsets = [0, 0], sizes = [1, 128], strides = [1, 1]} : vector<4x128xf32> to vector<1x128xf32>
    %51 = vector.extract_strided_slice %1 {offsets = [2, 0], sizes = [1, 128], strides = [1, 1]} : vector<4x128xf32> to vector<1x128xf32>
    %52 = arith.mulf %50, %51 : vector<1x128xf32>
    %53 = vector.broadcast %52 : vector<1x128xf32> to vector<8x128xf32>
    %54 = arith.mulf %13, %53 : vector<8x128xf32>
    %55 = vector.extract_strided_slice %1 {offsets = [0, 0], sizes = [1, 128], strides = [1, 1]} : vector<4x128xf32> to vector<1x128xf32>
    %56 = vector.extract_strided_slice %1 {offsets = [3, 0], sizes = [1, 128], strides = [1, 1]} : vector<4x128xf32> to vector<1x128xf32>
    %57 = arith.mulf %55, %56 : vector<1x128xf32>
    %58 = vector.broadcast %57 : vector<1x128xf32> to vector<8x128xf32>
    %59 = arith.mulf %13, %58 : vector<8x128xf32>
    %60 = vector.extract_strided_slice %1 {offsets = [1, 0], sizes = [1, 128], strides = [1, 1]} : vector<4x128xf32> to vector<1x128xf32>
    %61 = vector.extract_strided_slice %1 {offsets = [1, 0], sizes = [1, 128], strides = [1, 1]} : vector<4x128xf32> to vector<1x128xf32>
    %62 = arith.mulf %60, %61 : vector<1x128xf32>
    %63 = vector.broadcast %62 : vector<1x128xf32> to vector<8x128xf32>
    %64 = arith.mulf %13, %63 : vector<8x128xf32>
    %65 = vector.extract_strided_slice %1 {offsets = [1, 0], sizes = [1, 128], strides = [1, 1]} : vector<4x128xf32> to vector<1x128xf32>
    %66 = vector.extract_strided_slice %1 {offsets = [2, 0], sizes = [1, 128], strides = [1, 1]} : vector<4x128xf32> to vector<1x128xf32>
    %67 = arith.mulf %65, %66 : vector<1x128xf32>
    %68 = vector.broadcast %67 : vector<1x128xf32> to vector<8x128xf32>
    %69 = arith.mulf %13, %68 : vector<8x128xf32>
    %70 = vector.extract_strided_slice %1 {offsets = [1, 0], sizes = [1, 128], strides = [1, 1]} : vector<4x128xf32> to vector<1x128xf32>
    %71 = vector.extract_strided_slice %1 {offsets = [3, 0], sizes = [1, 128], strides = [1, 1]} : vector<4x128xf32> to vector<1x128xf32>
    %72 = arith.mulf %70, %71 : vector<1x128xf32>
    %73 = vector.broadcast %72 : vector<1x128xf32> to vector<8x128xf32>
    %74 = arith.mulf %13, %73 : vector<8x128xf32>
    %75 = vector.extract_strided_slice %1 {offsets = [2, 0], sizes = [1, 128], strides = [1, 1]} : vector<4x128xf32> to vector<1x128xf32>
    %76 = vector.extract_strided_slice %1 {offsets = [2, 0], sizes = [1, 128], strides = [1, 1]} : vector<4x128xf32> to vector<1x128xf32>
    %77 = arith.mulf %75, %76 : vector<1x128xf32>
    %78 = vector.broadcast %77 : vector<1x128xf32> to vector<8x128xf32>
    %79 = arith.mulf %13, %78 : vector<8x128xf32>
    %80 = vector.extract_strided_slice %1 {offsets = [2, 0], sizes = [1, 128], strides = [1, 1]} : vector<4x128xf32> to vector<1x128xf32>
    %81 = vector.extract_strided_slice %1 {offsets = [3, 0], sizes = [1, 128], strides = [1, 1]} : vector<4x128xf32> to vector<1x128xf32>
    %82 = arith.mulf %80, %81 : vector<1x128xf32>
    %83 = vector.broadcast %82 : vector<1x128xf32> to vector<8x128xf32>
    %84 = arith.mulf %13, %83 : vector<8x128xf32>
    %85 = vector.extract_strided_slice %1 {offsets = [3, 0], sizes = [1, 128], strides = [1, 1]} : vector<4x128xf32> to vector<1x128xf32>
    %86 = vector.extract_strided_slice %1 {offsets = [3, 0], sizes = [1, 128], strides = [1, 1]} : vector<4x128xf32> to vector<1x128xf32>
    %87 = arith.mulf %85, %86 : vector<1x128xf32>
    %88 = vector.broadcast %87 : vector<1x128xf32> to vector<8x128xf32>
    %89 = arith.mulf %13, %88 : vector<8x128xf32>
    %cst_9 = arith.constant 0.000000e+00 : f32
    %90 = vector.broadcast %cst_9 : f32 to vector<8x128xf32>
    %91 = tpu.concatenate %27, %30, %33, %36, %39, %44, %49, %54, %59, %64, %69, %74, %79, %84, %89, %90 in 0 : vector<8x128xf32>, vector<8x128xf32>, vector<8x128xf32>, vector<8x128xf32>, vector<8x128xf32>, vector<8x128xf32>, vector<8x128xf32>, vector<8x128xf32>, vector<8x128xf32>, vector<8x128xf32>, vector<8x128xf32>, vector<8x128xf32>, vector<8x128xf32>, vector<8x128xf32>, vector<8x128xf32>, vector<8x128xf32> -> vector<128x128xf32>
    %c0_10 = arith.constant 0 : index
    %c0_11 = arith.constant 0 : index
    %c0_12 = arith.constant 0 : index
    %92 = vector.load %arg3[%c0_10, %c0_11, %c0_12] : memref<3x128x128xf32, #tpu.memory_space<vmem>>, vector<1x128x128xf32>
    %93 = vector.shape_cast %92 : vector<1x128x128xf32> to vector<128x128xf32>
    %cst_13 = arith.constant dense<0.000000e+00> : vector<128x128xf32>
    %94 = tpu.matmul %91, %93, %cst_13 {dimension_numbers = #tpu.dot_dimension_numbers<[1], [0], [0], [1], [0, 0, 1, 1], [], []>} : vector<128x128xf32>, vector<128x128xf32>, vector<128x128xf32> -> vector<128x128xf32>
    %95 = vector.extract_strided_slice %94 {offsets = [0, 0], sizes = [8, 128], strides = [1, 1]} : vector<128x128xf32> to vector<8x128xf32>
    %c1 = arith.constant 1 : index
    %c0_14 = arith.constant 0 : index
    %96 = vector.load %arg4[%c1, %c0_14] : memref<4x128xf32, #tpu.memory_space<vmem>>, vector<1x128xf32>
    %97 = vector.broadcast %96 : vector<1x128xf32> to vector<8x128xf32>
    %98 = arith.addf %95, %97 : vector<8x128xf32>
    %99 = vector.extract_strided_slice %94 {offsets = [8, 0], sizes = [8, 128], strides = [1, 1]} : vector<128x128xf32> to vector<8x128xf32>
    %100 = vector.extract_strided_slice %94 {offsets = [16, 0], sizes = [8, 128], strides = [1, 1]} : vector<128x128xf32> to vector<8x128xf32>
    %101 = vector.extract_strided_slice %94 {offsets = [24, 0], sizes = [8, 128], strides = [1, 1]} : vector<128x128xf32> to vector<8x128xf32>
    %102 = vector.extract_strided_slice %94 {offsets = [32, 0], sizes = [8, 128], strides = [1, 1]} : vector<128x128xf32> to vector<8x128xf32>
    %103 = vector.extract_strided_slice %94 {offsets = [40, 0], sizes = [8, 128], strides = [1, 1]} : vector<128x128xf32> to vector<8x128xf32>
    %104 = vector.extract_strided_slice %94 {offsets = [48, 0], sizes = [8, 128], strides = [1, 1]} : vector<128x128xf32> to vector<8x128xf32>
    %105 = vector.extract_strided_slice %94 {offsets = [56, 0], sizes = [8, 128], strides = [1, 1]} : vector<128x128xf32> to vector<8x128xf32>
    %106 = vector.extract_strided_slice %94 {offsets = [64, 0], sizes = [8, 128], strides = [1, 1]} : vector<128x128xf32> to vector<8x128xf32>
    %107 = vector.extract_strided_slice %94 {offsets = [72, 0], sizes = [8, 128], strides = [1, 1]} : vector<128x128xf32> to vector<8x128xf32>
    %108 = vector.extract_strided_slice %94 {offsets = [80, 0], sizes = [8, 128], strides = [1, 1]} : vector<128x128xf32> to vector<8x128xf32>
    %109 = vector.extract_strided_slice %94 {offsets = [88, 0], sizes = [8, 128], strides = [1, 1]} : vector<128x128xf32> to vector<8x128xf32>
    %110 = vector.extract_strided_slice %94 {offsets = [96, 0], sizes = [8, 128], strides = [1, 1]} : vector<128x128xf32> to vector<8x128xf32>
    %111 = vector.extract_strided_slice %94 {offsets = [104, 0], sizes = [8, 128], strides = [1, 1]} : vector<128x128xf32> to vector<8x128xf32>
    %112 = vector.extract_strided_slice %94 {offsets = [112, 0], sizes = [8, 128], strides = [1, 1]} : vector<128x128xf32> to vector<8x128xf32>
    %113 = arith.negf %98 : vector<8x128xf32>
    %114 = math.exp %113 : vector<8x128xf32>
    %cst_15 = arith.constant 1.000000e+00 : f32
    %115 = vector.broadcast %cst_15 : f32 to vector<8x128xf32>
    %116 = arith.addf %115, %114 : vector<8x128xf32>
    %117 = arith.divf %115, %116 : vector<8x128xf32>
    %cst_16 = arith.constant 1.000000e+00 : f32
    %118 = vector.broadcast %cst_16 : f32 to vector<8x128xf32>
    %119 = arith.subf %118, %117 : vector<8x128xf32>
    %120 = arith.mulf %117, %119 : vector<8x128xf32>
    %cst_17 = arith.constant 0.000000e+00 : f32
    %121 = vector.broadcast %cst_17 : f32 to vector<8x128xf32>
    %122 = arith.maximumf %98, %121 : vector<8x128xf32>
    %123 = vector.broadcast %cst_17 : f32 to vector<8x128xf32>
    %124 = arith.subf %98, %123 : vector<8x128xf32>
    %125 = arith.cmpf one, %124, %124 : vector<8x128xf32>
    %126 = vector.broadcast %cst_17 : f32 to vector<8x128xf32>
    %127 = arith.addf %98, %126 : vector<8x128xf32>
    %128 = math.absf %124 : vector<8x128xf32>
    %cst_18 = arith.constant 0.000000e+00 : f32
    %129 = vector.broadcast %cst_18 : f32 to vector<8x128xf32>
    %130 = arith.subf %129, %128 : vector<8x128xf32>
    %131 = math.exp %130 : vector<8x128xf32>
    %132 = math.log1p %131 : vector<8x128xf32>
    %133 = arith.addf %122, %132 : vector<8x128xf32>
    %134 = arith.select %125, %127, %133 : vector<8x128xi1>, vector<8x128xf32>
    %135 = arith.mulf %117, %99 : vector<8x128xf32>
    %136 = arith.mulf %117, %100 : vector<8x128xf32>
    %137 = arith.mulf %117, %101 : vector<8x128xf32>
    %138 = arith.mulf %117, %102 : vector<8x128xf32>
    %139 = arith.mulf %99, %99 : vector<8x128xf32>
    %140 = arith.mulf %120, %139 : vector<8x128xf32>
    %141 = arith.mulf %117, %103 : vector<8x128xf32>
    %142 = arith.addf %140, %141 : vector<8x128xf32>
    %143 = arith.mulf %99, %100 : vector<8x128xf32>
    %144 = arith.mulf %120, %143 : vector<8x128xf32>
    %145 = arith.mulf %117, %104 : vector<8x128xf32>
    %146 = arith.addf %144, %145 : vector<8x128xf32>
    %147 = arith.mulf %99, %101 : vector<8x128xf32>
    %148 = arith.mulf %120, %147 : vector<8x128xf32>
    %149 = arith.mulf %117, %105 : vector<8x128xf32>
    %150 = arith.addf %148, %149 : vector<8x128xf32>
    %151 = arith.mulf %99, %102 : vector<8x128xf32>
    %152 = arith.mulf %120, %151 : vector<8x128xf32>
    %153 = arith.mulf %117, %106 : vector<8x128xf32>
    %154 = arith.addf %152, %153 : vector<8x128xf32>
    %155 = arith.mulf %100, %100 : vector<8x128xf32>
    %156 = arith.mulf %120, %155 : vector<8x128xf32>
    %157 = arith.mulf %117, %107 : vector<8x128xf32>
    %158 = arith.addf %156, %157 : vector<8x128xf32>
    %159 = arith.mulf %100, %101 : vector<8x128xf32>
    %160 = arith.mulf %120, %159 : vector<8x128xf32>
    %161 = arith.mulf %117, %108 : vector<8x128xf32>
    %162 = arith.addf %160, %161 : vector<8x128xf32>
    %163 = arith.mulf %100, %102 : vector<8x128xf32>
    %164 = arith.mulf %120, %163 : vector<8x128xf32>
    %165 = arith.mulf %117, %109 : vector<8x128xf32>
    %166 = arith.addf %164, %165 : vector<8x128xf32>
    %167 = arith.mulf %101, %101 : vector<8x128xf32>
    %168 = arith.mulf %120, %167 : vector<8x128xf32>
    %169 = arith.mulf %117, %110 : vector<8x128xf32>
    %170 = arith.addf %168, %169 : vector<8x128xf32>
    %171 = arith.mulf %101, %102 : vector<8x128xf32>
    %172 = arith.mulf %120, %171 : vector<8x128xf32>
    %173 = arith.mulf %117, %111 : vector<8x128xf32>
    %174 = arith.addf %172, %173 : vector<8x128xf32>
    %175 = arith.mulf %102, %102 : vector<8x128xf32>
    %176 = arith.mulf %120, %175 : vector<8x128xf32>
    %177 = arith.mulf %117, %112 : vector<8x128xf32>
    %178 = arith.addf %176, %177 : vector<8x128xf32>
    %179 = tpu.concatenate %134, %135, %136, %137, %138, %142, %146, %150, %154, %158, %162, %166, %170, %174, %178, %90 in 0 : vector<8x128xf32>, vector<8x128xf32>, vector<8x128xf32>, vector<8x128xf32>, vector<8x128xf32>, vector<8x128xf32>, vector<8x128xf32>, vector<8x128xf32>, vector<8x128xf32>, vector<8x128xf32>, vector<8x128xf32>, vector<8x128xf32>, vector<8x128xf32>, vector<8x128xf32>, vector<8x128xf32>, vector<8x128xf32> -> vector<128x128xf32>
    %c1_19 = arith.constant 1 : index
    %c0_20 = arith.constant 0 : index
    %c0_21 = arith.constant 0 : index
    %180 = vector.load %arg3[%c1_19, %c0_20, %c0_21] : memref<3x128x128xf32, #tpu.memory_space<vmem>>, vector<1x128x128xf32>
    %181 = vector.shape_cast %180 : vector<1x128x128xf32> to vector<128x128xf32>
    %cst_22 = arith.constant dense<0.000000e+00> : vector<128x128xf32>
    %182 = tpu.matmul %179, %181, %cst_22 {dimension_numbers = #tpu.dot_dimension_numbers<[1], [0], [0], [1], [0, 0, 1, 1], [], []>} : vector<128x128xf32>, vector<128x128xf32>, vector<128x128xf32> -> vector<128x128xf32>
    %183 = vector.extract_strided_slice %182 {offsets = [0, 0], sizes = [8, 128], strides = [1, 1]} : vector<128x128xf32> to vector<8x128xf32>
    %c2 = arith.constant 2 : index
    %c0_23 = arith.constant 0 : index
    %184 = vector.load %arg4[%c2, %c0_23] : memref<4x128xf32, #tpu.memory_space<vmem>>, vector<1x128xf32>
    %185 = vector.broadcast %184 : vector<1x128xf32> to vector<8x128xf32>
    %186 = arith.addf %183, %185 : vector<8x128xf32>
    %187 = vector.extract_strided_slice %182 {offsets = [8, 0], sizes = [8, 128], strides = [1, 1]} : vector<128x128xf32> to vector<8x128xf32>
    %188 = vector.extract_strided_slice %182 {offsets = [16, 0], sizes = [8, 128], strides = [1, 1]} : vector<128x128xf32> to vector<8x128xf32>
    %189 = vector.extract_strided_slice %182 {offsets = [24, 0], sizes = [8, 128], strides = [1, 1]} : vector<128x128xf32> to vector<8x128xf32>
    %190 = vector.extract_strided_slice %182 {offsets = [32, 0], sizes = [8, 128], strides = [1, 1]} : vector<128x128xf32> to vector<8x128xf32>
    %191 = vector.extract_strided_slice %182 {offsets = [40, 0], sizes = [8, 128], strides = [1, 1]} : vector<128x128xf32> to vector<8x128xf32>
    %192 = vector.extract_strided_slice %182 {offsets = [48, 0], sizes = [8, 128], strides = [1, 1]} : vector<128x128xf32> to vector<8x128xf32>
    %193 = vector.extract_strided_slice %182 {offsets = [56, 0], sizes = [8, 128], strides = [1, 1]} : vector<128x128xf32> to vector<8x128xf32>
    %194 = vector.extract_strided_slice %182 {offsets = [64, 0], sizes = [8, 128], strides = [1, 1]} : vector<128x128xf32> to vector<8x128xf32>
    %195 = vector.extract_strided_slice %182 {offsets = [72, 0], sizes = [8, 128], strides = [1, 1]} : vector<128x128xf32> to vector<8x128xf32>
    %196 = vector.extract_strided_slice %182 {offsets = [80, 0], sizes = [8, 128], strides = [1, 1]} : vector<128x128xf32> to vector<8x128xf32>
    %197 = vector.extract_strided_slice %182 {offsets = [88, 0], sizes = [8, 128], strides = [1, 1]} : vector<128x128xf32> to vector<8x128xf32>
    %198 = vector.extract_strided_slice %182 {offsets = [96, 0], sizes = [8, 128], strides = [1, 1]} : vector<128x128xf32> to vector<8x128xf32>
    %199 = vector.extract_strided_slice %182 {offsets = [104, 0], sizes = [8, 128], strides = [1, 1]} : vector<128x128xf32> to vector<8x128xf32>
    %200 = vector.extract_strided_slice %182 {offsets = [112, 0], sizes = [8, 128], strides = [1, 1]} : vector<128x128xf32> to vector<8x128xf32>
    %201 = arith.negf %186 : vector<8x128xf32>
    %202 = math.exp %201 : vector<8x128xf32>
    %cst_24 = arith.constant 1.000000e+00 : f32
    %203 = vector.broadcast %cst_24 : f32 to vector<8x128xf32>
    %204 = arith.addf %203, %202 : vector<8x128xf32>
    %205 = arith.divf %203, %204 : vector<8x128xf32>
    %cst_25 = arith.constant 1.000000e+00 : f32
    %206 = vector.broadcast %cst_25 : f32 to vector<8x128xf32>
    %207 = arith.subf %206, %205 : vector<8x128xf32>
    %208 = arith.mulf %205, %207 : vector<8x128xf32>
    %cst_26 = arith.constant 0.000000e+00 : f32
    %209 = vector.broadcast %cst_26 : f32 to vector<8x128xf32>
    %210 = arith.maximumf %186, %209 : vector<8x128xf32>
    %211 = vector.broadcast %cst_26 : f32 to vector<8x128xf32>
    %212 = arith.subf %186, %211 : vector<8x128xf32>
    %213 = arith.cmpf one, %212, %212 : vector<8x128xf32>
    %214 = vector.broadcast %cst_26 : f32 to vector<8x128xf32>
    %215 = arith.addf %186, %214 : vector<8x128xf32>
    %216 = math.absf %212 : vector<8x128xf32>
    %cst_27 = arith.constant 0.000000e+00 : f32
    %217 = vector.broadcast %cst_27 : f32 to vector<8x128xf32>
    %218 = arith.subf %217, %216 : vector<8x128xf32>
    %219 = math.exp %218 : vector<8x128xf32>
    %220 = math.log1p %219 : vector<8x128xf32>
    %221 = arith.addf %210, %220 : vector<8x128xf32>
    %222 = arith.select %213, %215, %221 : vector<8x128xi1>, vector<8x128xf32>
    %223 = arith.mulf %205, %187 : vector<8x128xf32>
    %224 = arith.mulf %205, %188 : vector<8x128xf32>
    %225 = arith.mulf %205, %189 : vector<8x128xf32>
    %226 = arith.mulf %205, %190 : vector<8x128xf32>
    %227 = arith.mulf %187, %187 : vector<8x128xf32>
    %228 = arith.mulf %208, %227 : vector<8x128xf32>
    %229 = arith.mulf %205, %191 : vector<8x128xf32>
    %230 = arith.addf %228, %229 : vector<8x128xf32>
    %231 = arith.mulf %187, %188 : vector<8x128xf32>
    %232 = arith.mulf %208, %231 : vector<8x128xf32>
    %233 = arith.mulf %205, %192 : vector<8x128xf32>
    %234 = arith.addf %232, %233 : vector<8x128xf32>
    %235 = arith.mulf %187, %189 : vector<8x128xf32>
    %236 = arith.mulf %208, %235 : vector<8x128xf32>
    %237 = arith.mulf %205, %193 : vector<8x128xf32>
    %238 = arith.addf %236, %237 : vector<8x128xf32>
    %239 = arith.mulf %187, %190 : vector<8x128xf32>
    %240 = arith.mulf %208, %239 : vector<8x128xf32>
    %241 = arith.mulf %205, %194 : vector<8x128xf32>
    %242 = arith.addf %240, %241 : vector<8x128xf32>
    %243 = arith.mulf %188, %188 : vector<8x128xf32>
    %244 = arith.mulf %208, %243 : vector<8x128xf32>
    %245 = arith.mulf %205, %195 : vector<8x128xf32>
    %246 = arith.addf %244, %245 : vector<8x128xf32>
    %247 = arith.mulf %188, %189 : vector<8x128xf32>
    %248 = arith.mulf %208, %247 : vector<8x128xf32>
    %249 = arith.mulf %205, %196 : vector<8x128xf32>
    %250 = arith.addf %248, %249 : vector<8x128xf32>
    %251 = arith.mulf %188, %190 : vector<8x128xf32>
    %252 = arith.mulf %208, %251 : vector<8x128xf32>
    %253 = arith.mulf %205, %197 : vector<8x128xf32>
    %254 = arith.addf %252, %253 : vector<8x128xf32>
    %255 = arith.mulf %189, %189 : vector<8x128xf32>
    %256 = arith.mulf %208, %255 : vector<8x128xf32>
    %257 = arith.mulf %205, %198 : vector<8x128xf32>
    %258 = arith.addf %256, %257 : vector<8x128xf32>
    %259 = arith.mulf %189, %190 : vector<8x128xf32>
    %260 = arith.mulf %208, %259 : vector<8x128xf32>
    %261 = arith.mulf %205, %199 : vector<8x128xf32>
    %262 = arith.addf %260, %261 : vector<8x128xf32>
    %263 = arith.mulf %190, %190 : vector<8x128xf32>
    %264 = arith.mulf %208, %263 : vector<8x128xf32>
    %265 = arith.mulf %205, %200 : vector<8x128xf32>
    %266 = arith.addf %264, %265 : vector<8x128xf32>
    %267 = tpu.concatenate %222, %223, %224, %225, %226, %230, %234, %238, %242, %246, %250, %254, %258, %262, %266, %90 in 0 : vector<8x128xf32>, vector<8x128xf32>, vector<8x128xf32>, vector<8x128xf32>, vector<8x128xf32>, vector<8x128xf32>, vector<8x128xf32>, vector<8x128xf32>, vector<8x128xf32>, vector<8x128xf32>, vector<8x128xf32>, vector<8x128xf32>, vector<8x128xf32>, vector<8x128xf32>, vector<8x128xf32>, vector<8x128xf32> -> vector<128x128xf32>
    %c2_28 = arith.constant 2 : index
    %c0_29 = arith.constant 0 : index
    %c0_30 = arith.constant 0 : index
    %268 = vector.load %arg3[%c2_28, %c0_29, %c0_30] : memref<3x128x128xf32, #tpu.memory_space<vmem>>, vector<1x128x128xf32>
    %269 = vector.shape_cast %268 : vector<1x128x128xf32> to vector<128x128xf32>
    %cst_31 = arith.constant dense<0.000000e+00> : vector<128x128xf32>
    %270 = tpu.matmul %267, %269, %cst_31 {dimension_numbers = #tpu.dot_dimension_numbers<[1], [0], [0], [1], [0, 0, 1, 1], [], []>} : vector<128x128xf32>, vector<128x128xf32>, vector<128x128xf32> -> vector<128x128xf32>
    %271 = vector.extract_strided_slice %270 {offsets = [0, 0], sizes = [8, 128], strides = [1, 1]} : vector<128x128xf32> to vector<8x128xf32>
    %c3 = arith.constant 3 : index
    %c0_32 = arith.constant 0 : index
    %272 = vector.load %arg4[%c3, %c0_32] : memref<4x128xf32, #tpu.memory_space<vmem>>, vector<1x128xf32>
    %273 = vector.broadcast %272 : vector<1x128xf32> to vector<8x128xf32>
    %274 = arith.addf %271, %273 : vector<8x128xf32>
    %275 = vector.extract_strided_slice %270 {offsets = [8, 0], sizes = [8, 128], strides = [1, 1]} : vector<128x128xf32> to vector<8x128xf32>
    %276 = vector.extract_strided_slice %270 {offsets = [16, 0], sizes = [8, 128], strides = [1, 1]} : vector<128x128xf32> to vector<8x128xf32>
    %277 = vector.extract_strided_slice %270 {offsets = [24, 0], sizes = [8, 128], strides = [1, 1]} : vector<128x128xf32> to vector<8x128xf32>
    %278 = vector.extract_strided_slice %270 {offsets = [32, 0], sizes = [8, 128], strides = [1, 1]} : vector<128x128xf32> to vector<8x128xf32>
    %279 = vector.extract_strided_slice %270 {offsets = [40, 0], sizes = [8, 128], strides = [1, 1]} : vector<128x128xf32> to vector<8x128xf32>
    %280 = vector.extract_strided_slice %270 {offsets = [48, 0], sizes = [8, 128], strides = [1, 1]} : vector<128x128xf32> to vector<8x128xf32>
    %281 = vector.extract_strided_slice %270 {offsets = [56, 0], sizes = [8, 128], strides = [1, 1]} : vector<128x128xf32> to vector<8x128xf32>
    %282 = vector.extract_strided_slice %270 {offsets = [64, 0], sizes = [8, 128], strides = [1, 1]} : vector<128x128xf32> to vector<8x128xf32>
    %283 = vector.extract_strided_slice %270 {offsets = [72, 0], sizes = [8, 128], strides = [1, 1]} : vector<128x128xf32> to vector<8x128xf32>
    %284 = vector.extract_strided_slice %270 {offsets = [80, 0], sizes = [8, 128], strides = [1, 1]} : vector<128x128xf32> to vector<8x128xf32>
    %285 = vector.extract_strided_slice %270 {offsets = [88, 0], sizes = [8, 128], strides = [1, 1]} : vector<128x128xf32> to vector<8x128xf32>
    %286 = vector.extract_strided_slice %270 {offsets = [96, 0], sizes = [8, 128], strides = [1, 1]} : vector<128x128xf32> to vector<8x128xf32>
    %287 = vector.extract_strided_slice %270 {offsets = [104, 0], sizes = [8, 128], strides = [1, 1]} : vector<128x128xf32> to vector<8x128xf32>
    %288 = vector.extract_strided_slice %270 {offsets = [112, 0], sizes = [8, 128], strides = [1, 1]} : vector<128x128xf32> to vector<8x128xf32>
    %289 = arith.negf %274 : vector<8x128xf32>
    %290 = math.exp %289 : vector<8x128xf32>
    %cst_33 = arith.constant 1.000000e+00 : f32
    %291 = vector.broadcast %cst_33 : f32 to vector<8x128xf32>
    %292 = arith.addf %291, %290 : vector<8x128xf32>
    %293 = arith.divf %291, %292 : vector<8x128xf32>
    %cst_34 = arith.constant 1.000000e+00 : f32
    %294 = vector.broadcast %cst_34 : f32 to vector<8x128xf32>
    %295 = arith.subf %294, %293 : vector<8x128xf32>
    %296 = arith.mulf %293, %295 : vector<8x128xf32>
    %cst_35 = arith.constant 0.000000e+00 : f32
    %297 = vector.broadcast %cst_35 : f32 to vector<8x128xf32>
    %298 = arith.maximumf %274, %297 : vector<8x128xf32>
    %299 = vector.broadcast %cst_35 : f32 to vector<8x128xf32>
    %300 = arith.subf %274, %299 : vector<8x128xf32>
    %301 = arith.cmpf one, %300, %300 : vector<8x128xf32>
    %302 = vector.broadcast %cst_35 : f32 to vector<8x128xf32>
    %303 = arith.addf %274, %302 : vector<8x128xf32>
    %304 = math.absf %300 : vector<8x128xf32>
    %cst_36 = arith.constant 0.000000e+00 : f32
    %305 = vector.broadcast %cst_36 : f32 to vector<8x128xf32>
    %306 = arith.subf %305, %304 : vector<8x128xf32>
    %307 = math.exp %306 : vector<8x128xf32>
    %308 = math.log1p %307 : vector<8x128xf32>
    %309 = arith.addf %298, %308 : vector<8x128xf32>
    %310 = arith.select %301, %303, %309 : vector<8x128xi1>, vector<8x128xf32>
    %311 = arith.mulf %293, %275 : vector<8x128xf32>
    %312 = arith.mulf %293, %276 : vector<8x128xf32>
    %313 = arith.mulf %293, %277 : vector<8x128xf32>
    %314 = arith.mulf %293, %278 : vector<8x128xf32>
    %315 = arith.mulf %275, %275 : vector<8x128xf32>
    %316 = arith.mulf %296, %315 : vector<8x128xf32>
    %317 = arith.mulf %293, %279 : vector<8x128xf32>
    %318 = arith.addf %316, %317 : vector<8x128xf32>
    %319 = arith.mulf %275, %276 : vector<8x128xf32>
    %320 = arith.mulf %296, %319 : vector<8x128xf32>
    %321 = arith.mulf %293, %280 : vector<8x128xf32>
    %322 = arith.addf %320, %321 : vector<8x128xf32>
    %323 = arith.mulf %275, %277 : vector<8x128xf32>
    %324 = arith.mulf %296, %323 : vector<8x128xf32>
    %325 = arith.mulf %293, %281 : vector<8x128xf32>
    %326 = arith.addf %324, %325 : vector<8x128xf32>
    %327 = arith.mulf %275, %278 : vector<8x128xf32>
    %328 = arith.mulf %296, %327 : vector<8x128xf32>
    %329 = arith.mulf %293, %282 : vector<8x128xf32>
    %330 = arith.addf %328, %329 : vector<8x128xf32>
    %331 = arith.mulf %276, %276 : vector<8x128xf32>
    %332 = arith.mulf %296, %331 : vector<8x128xf32>
    %333 = arith.mulf %293, %283 : vector<8x128xf32>
    %334 = arith.addf %332, %333 : vector<8x128xf32>
    %335 = arith.mulf %276, %277 : vector<8x128xf32>
    %336 = arith.mulf %296, %335 : vector<8x128xf32>
    %337 = arith.mulf %293, %284 : vector<8x128xf32>
    %338 = arith.addf %336, %337 : vector<8x128xf32>
    %339 = arith.mulf %276, %278 : vector<8x128xf32>
    %340 = arith.mulf %296, %339 : vector<8x128xf32>
    %341 = arith.mulf %293, %285 : vector<8x128xf32>
    %342 = arith.addf %340, %341 : vector<8x128xf32>
    %343 = arith.mulf %277, %277 : vector<8x128xf32>
    %344 = arith.mulf %296, %343 : vector<8x128xf32>
    %345 = arith.mulf %293, %286 : vector<8x128xf32>
    %346 = arith.addf %344, %345 : vector<8x128xf32>
    %347 = arith.mulf %277, %278 : vector<8x128xf32>
    %348 = arith.mulf %296, %347 : vector<8x128xf32>
    %349 = arith.mulf %293, %287 : vector<8x128xf32>
    %350 = arith.addf %348, %349 : vector<8x128xf32>
    %351 = arith.mulf %278, %278 : vector<8x128xf32>
    %352 = arith.mulf %296, %351 : vector<8x128xf32>
    %353 = arith.mulf %293, %288 : vector<8x128xf32>
    %354 = arith.addf %352, %353 : vector<8x128xf32>
    %355 = tpu.concatenate %310, %311, %312, %313, %314, %318, %322, %326, %330, %334, %338, %342, %346, %350, %354, %90 in 0 : vector<8x128xf32>, vector<8x128xf32>, vector<8x128xf32>, vector<8x128xf32>, vector<8x128xf32>, vector<8x128xf32>, vector<8x128xf32>, vector<8x128xf32>, vector<8x128xf32>, vector<8x128xf32>, vector<8x128xf32>, vector<8x128xf32>, vector<8x128xf32>, vector<8x128xf32>, vector<8x128xf32>, vector<8x128xf32> -> vector<128x128xf32>
    %c0_37 = arith.constant 0 : index
    %c0_38 = arith.constant 0 : index
    %356 = vector.load %arg5[%c0_37, %c0_38] : memref<1x128xf32, #tpu.memory_space<vmem>>, vector<1x128xf32>
    %357 = vector.broadcast %356 : vector<1x128xf32> to vector<128x128xf32>
    %358 = arith.mulf %355, %357 : vector<128x128xf32>
    %cst_39 = arith.constant dense<0.000000e+00> : vector<128xf32>
    %359 = vector.multi_reduction <add>, %358, %cst_39 [1] : vector<128x128xf32> to vector<128xf32>
    %360 = vector.shape_cast %359 : vector<128xf32> to vector<128x1xf32>
    %c0_40 = arith.constant 0 : index
    %c0_41 = arith.constant 0 : index
    %361 = vector.load %arg6[%c0_40, %c0_41] : memref<128x1xf32, #tpu.memory_space<vmem>>, vector<128x1xf32>
    tpu.vector_store %arg6[%c0_40, %c0_41], %360 {strides = array<i32>} : memref<128x1xf32, #tpu.memory_space<vmem>>, vector<128x1xf32>,
    return
  }
  func.func @transform_0(%arg0: i32) -> (i32, i32) {
    %c0_i32 = arith.constant 0 : i32
    %c0_i32_0 = arith.constant 0 : i32
    return %arg0, %c0_i32 : i32, i32
  }
  func.func @transform_1(%arg0: i32) -> (i32, i32) {
    %c0_i32 = arith.constant 0 : i32
    %c0_i32_0 = arith.constant 0 : i32
    %c0_i32_1 = arith.constant 0 : i32
    return %c0_i32, %c0_i32_0 : i32, i32
  }
  func.func @transform_2(%arg0: i32) -> (i32, i32, i32) {
    %c0_i32 = arith.constant 0 : i32
    %c0_i32_0 = arith.constant 0 : i32
    %c0_i32_1 = arith.constant 0 : i32
    %c0_i32_2 = arith.constant 0 : i32
    return %c0_i32, %c0_i32_0, %c0_i32_1 : i32, i32, i32
  }
  func.func @transform_3(%arg0: i32) -> (i32, i32) {
    %c0_i32 = arith.constant 0 : i32
    %c0_i32_0 = arith.constant 0 : i32
    %c0_i32_1 = arith.constant 0 : i32
    return %c0_i32, %c0_i32_0 : i32, i32
  }
  func.func @transform_4(%arg0: i32) -> (i32, i32) {
    %c0_i32 = arith.constant 0 : i32
    %c0_i32_0 = arith.constant 0 : i32
    %c0_i32_1 = arith.constant 0 : i32
    return %c0_i32, %c0_i32_0 : i32, i32
  }
  func.func @transform_5(%arg0: i32) -> (i32, i32) {
    %c0_i32 = arith.constant 0 : i32
    %c0_i32_0 = arith.constant 0 : i32
    return %arg0, %c0_i32 : i32, i32
  }
}

</mosaic_0001>

<llo_original>
// kernel: squeeze.10
$region0: #{squeeze.10}
  %s0 = inlined_call_operand.vmem [shape: f32[128], index: 0, kind: input, shape index: {}]
  %s1 = inlined_call_operand.vmem [shape: f32[1,16,8], index: 1, kind: output, shape index: {}]
  $region1: #{squeeze.10} parent=0
    #allocation0 [shape = 'u8[4096]{0}', space=vmem, size = 0x1000, scoped, tag = 'scoped mem for input reshape']
    %s3 = ssub.s32 2, 1
    %v4 = vld [vmem:[%s0] sm:%s3]
    %5 = vst [vmem:[#allocation0] sm:%s3] %v4
    %v6 = vld [vmem:[#allocation0] sm:$0x1]
    %vm7 = vcmask 64512
    %8 = vst.msk [vmem:[%s1] sm:$0x1] %vm7, %v6
    %v9 = vld [vmem:[#allocation0] sm:$0x1]
    %10 = vrot.lane.b32.xlu0 %v9, 120
    %v11 = vpop.permute.xlu0 %10
    %vm12 = vcmask 64512
    %s13 = scalar_lea.vmem %s1, 1
    %14 = vst.msk [vmem:[%s13] sm:$0x1] %vm12, %v11
    %v15 = vld [vmem:[#allocation0] sm:$0x1]
    %16 = vrot.lane.b32.xlu0 %v15, 112
    %v17 = vpop.permute.xlu0 %16
    %vm18 = vcmask 64512
    %s19 = scalar_lea.vmem %s1, 2
    %20 = vst.msk [vmem:[%s19] sm:$0x1] %vm18, %v17
    %v21 = vld [vmem:[#allocation0] sm:$0x1]
    %22 = vrot.lane.b32.xlu0 %v21, 104
    %v23 = vpop.permute.xlu0 %22
    %vm24 = vcmask 64512
    %s25 = scalar_lea.vmem %s1, 3
    %26 = vst.msk [vmem:[%s25] sm:$0x1] %vm24, %v23
    %v27 = vld [vmem:[#allocation0] sm:$0x1]
    %28 = vrot.lane.b32.xlu0 %v27, 96
    %v29 = vpop.permute.xlu0 %28
    %vm30 = vcmask 64512
    %s31 = scalar_lea.vmem %s1, 4
    %32 = vst.msk [vmem:[%s31] sm:$0x1] %vm30, %v29
    %v33 = vld [vmem:[#allocation0] sm:$0x1]
    %34 = vrot.lane.b32.xlu0 %v33, 88
    %v35 = vpop.permute.xlu0 %34
    %vm36 = vcmask 64512
    %s37 = scalar_lea.vmem %s1, 5
    %38 = vst.msk [vmem:[%s37] sm:$0x1] %vm36, %v35
    %v39 = vld [vmem:[#allocation0] sm:$0x1]
    %40 = vrot.lane.b32.xlu0 %v39, 80
    %v41 = vpop.permute.xlu0 %40
    %vm42 = vcmask 64512
    %s43 = scalar_lea.vmem %s1, 6
    %44 = vst.msk [vmem:[%s43] sm:$0x1] %vm42, %v41
    %v45 = vld [vmem:[#allocation0] sm:$0x1]
    %46 = vrot.lane.b32.xlu0 %v45, 72
    %v47 = vpop.permute.xlu0 %46
    %vm48 = vcmask 64512
    %s49 = scalar_lea.vmem %s1, 7
    %50 = vst.msk [vmem:[%s49] sm:$0x1] %vm48, %v47
    %v51 = vld [vmem:[#allocation0] sm:$0x1]
    %52 = vrot.lane.b32.xlu0 %v51, 64
    %v53 = vpop.permute.xlu0 %52
    %vm54 = vcmask 64512
    %s55 = scalar_lea.vmem %s1, 8
    %56 = vst.msk [vmem:[%s55] sm:$0x1] %vm54, %v53
    %v57 = vld [vmem:[#allocation0] sm:$0x1]
    %58 = vrot.lane.b32.xlu0 %v57, 56
    %v59 = vpop.permute.xlu0 %58
    %vm60 = vcmask 64512
    %s61 = scalar_lea.vmem %s1, 9
    %62 = vst.msk [vmem:[%s61] sm:$0x1] %vm60, %v59
    %v63 = vld [vmem:[#allocation0] sm:$0x1]
    %64 = vrot.lane.b32.xlu0 %v63, 48
    %v65 = vpop.permute.xlu0 %64
    %vm66 = vcmask 64512
    %s67 = scalar_lea.vmem %s1, 10
    %68 = vst.msk [vmem:[%s67] sm:$0x1] %vm66, %v65
    %v69 = vld [vmem:[#allocation0] sm:$0x1]
    %70 = vrot.lane.b32.xlu0 %v69, 40
    %v71 = vpop.permute.xlu0 %70
    %vm72 = vcmask 64512
    %s73 = scalar_lea.vmem %s1, 11
    %74 = vst.msk [vmem:[%s73] sm:$0x1] %vm72, %v71
    %v75 = vld [vmem:[#allocation0] sm:$0x1]
    %76 = vrot.lane.b32.xlu0 %v75, 32
    %v77 = vpop.permute.xlu0 %76
    %vm78 = vcmask 64512
    %s79 = scalar_lea.vmem %s1, 12
    %80 = vst.msk [vmem:[%s79] sm:$0x1] %vm78, %v77
    %v81 = vld [vmem:[#allocation0] sm:$0x1]
    %82 = vrot.lane.b32.xlu0 %v81, 24
    %v83 = vpop.permute.xlu0 %82
    %vm84 = vcmask 64512
    %s85 = scalar_lea.vmem %s1, 13
    %86 = vst.msk [vmem:[%s85] sm:$0x1] %vm84, %v83
    %v87 = vld [vmem:[#allocation0] sm:$0x1]
    %88 = vrot.lane.b32.xlu0 %v87, 16
    %v89 = vpop.permute.xlu0 %88
    %vm90 = vcmask 64512
    %s91 = scalar_lea.vmem %s1, 14
    %92 = vst.msk [vmem:[%s91] sm:$0x1] %vm90, %v89
    %v93 = vld [vmem:[#allocation0] sm:$0x1]
    %94 = vrot.lane.b32.xlu0 %v93, 8
    %v95 = vpop.permute.xlu0 %94
    %vm96 = vcmask 64512
    %s97 = scalar_lea.vmem %s1, 15
    %98 = vst.msk [vmem:[%s97] sm:$0x1] %vm96, %v95

// kernel: lnn_forward.1
$region0: #{lnn_forward.1}
  #allocation0 [shape = 'u32[]', space=smem, size = 0x4, offset = 0x4, fixed_abs, tag = 'smem constant byte address 0x4 - core index']
  #allocation1 [shape = 'u32[72,128]{1,0:T(1,128)}', space=vmem, size = 0x9000, scoped, tag = 'internal scratch']
  %s0 = inlined_call_operand.vmem [shape: f32[8,4], index: 0, kind: input, shape index: {}]
  %s1 = inlined_call_operand.vmem [shape: f32[4,128], index: 1, kind: input, shape index: {}]
  %s2 = inlined_call_operand.hbm [shape: f32[3,128,128], index: 2, kind: input, shape index: {}]
  %s3 = inlined_call_operand.vmem [shape: f32[4,128], index: 3, kind: input, shape index: {}]
  %s4 = inlined_call_operand.vmem [shape: f32[1,128], index: 4, kind: input, shape index: {}]
  %s5 = inlined_call_operand.vmem [shape: f32[128,1], index: 5, kind: output, shape index: {}]
  %s6 = sld [smem:[#allocation0]]
  $region34: #{lnn_forward.1} parent=0
    _
  %s8 = ssub.s32 1, %s6
  %s9 = scalar_select 0, %s8, %s6
  $region1: #{lnn_forward.1} parent=0
    #allocation2 [shape = 'u8[196608]{0}', space=vmem, size = 0x30000, scoped, tag = 'input window, operand 2, single buffered']
    #allocation3 [shape = 's32[1]{0}', space=sflag, size = 0x4, scoped, tag = 'scoped memory for lnn_forward.1']
    %10 = vsyncpa [#allocation3], 0
    // Predicated region
    $region2: #{lnn_forward.1} parent=1 // pred_check
      _
    $region3: #{lnn_forward.1} parent=1 // pred_check_branch
      %12 = sbr.rel (0) target = $region5
    $region4: #{lnn_forward.1} parent=1 // pred_region
      _
    $region5: #{lnn_forward.1} parent=1 // pred_fallthru
      _
    // Predicated region
    $region6: #{lnn_forward.1} parent=1 // pred_check
      _
    $region7: #{lnn_forward.1} parent=1 // pred_check_branch
      %14 = sbr.rel (0) target = $region9
    $region8: #{lnn_forward.1} parent=1 // pred_region
      _
    $region9: #{lnn_forward.1} parent=1 // pred_fallthru
      _
    // Predicated region
    $region10: #{lnn_forward.1} parent=1 // pred_check
      _
    $region11: #{lnn_forward.1} parent=1 // pred_check_branch
      %16 = sbr.rel (0) target = $region13
    $region12: #{lnn_forward.1} parent=1 // pred_region
      %18 = vsyncadd [#allocation3], 0
      %s19 = sshll.u32 %s2, 4
      %s20 = int_to_ptr.hbm [resolvable:$true] %s19
      %s21 = sshll.u32 [#allocation2], 4
      %s22 = int_to_ptr.vmem [resolvable:$true] %s21
      %27 = dma.hbm_to_vmem [thread:$0]  %s20, 6144, %s22, [#allocation3], 128, 128, 8
    $region13: #{lnn_forward.1} parent=1 // pred_fallthru
      _
    // Predicated region
    $region14: #{lnn_forward.1} parent=1 // pred_check
      _
    $region15: #{lnn_forward.1} parent=1 // pred_check_branch
      %29 = sbr.rel (0) target = $region17
    $region16: #{lnn_forward.1} parent=1 // pred_region
      _
    $region17: #{lnn_forward.1} parent=1 // pred_fallthru
      _
    // Predicated region
    $region18: #{lnn_forward.1} parent=1 // pred_check
      _
    $region19: #{lnn_forward.1} parent=1 // pred_check_branch
      %31 = sbr.rel (0) target = $region21
    $region20: #{lnn_forward.1} parent=1 // pred_region
      _
    $region21: #{lnn_forward.1} parent=1 // pred_fallthru
      _
    // Predicated region
    $region22: #{lnn_forward.1} parent=1 // pred_check
      _
    $region23: #{lnn_forward.1} parent=1 // pred_check_branch
      %33 = sbr.rel (0) target = $region25
    $region24: #{lnn_forward.1} parent=1 // pred_region
      %35 = dma.done [#allocation3], 6144
    $region25: #{lnn_forward.1} parent=1 // pred_fallthru
      _
    %v36 = vld [vmem:[%s0] sm:$0xff]
    %v37 = vld [vmem:[%s1] sm:$0xf]
    %v38 = vld [vmem:[%s3] sm:$0x1]
    %v39 = vperm.slane %v38, 0
    %vm40 = vcmask 31744
    %v42 = vsel %vm40, %v36, 0
    %vm44 = vcmask 1043456
    %v46 = vsel %vm44, %v37, 0
    %48 = vmatpush.msra.mxu0 0.0
    %49 = vmatpush.msra.mxu0 0.0
    %50 = vmatpush.msra.mxu0 0.0
    %51 = vmatpush.msra.mxu0 0.0
    %52 = vmatpush.msra.mxu0 0.0
    %53 = vmatpush.msra.mxu0 0.0
    %54 = vmatpush.msra.mxu0 0.0
    %55 = vmatpush.msra.mxu0 0.0
    %56 = vmatpush.msra.mxu0 0.0
    %57 = vmatpush.msra.mxu0 0.0
    %58 = vmatpush.msra.mxu0 0.0
    %59 = vmatpush.msra.mxu0 0.0
    %60 = vmatpush.msra.mxu0 0.0
    %61 = vmatpush.msra.mxu0 0.0
    %62 = vmatpush.msra.mxu0 0.0
    %63 = vmatpush.msra.mxu0 %v46
    %64 = vmatmul.f32.gmra.mxu0 %v42
    %v65 = vpop.f32.mrf.mxu0
    %v66 = vadd.f32 %v39, %v65
    %67 = vdwg.mxu0
    %v68 = vxor.u32 %v66, 2147483648
    %v69 = vmul.f32 %v68, 1.442695
    %v70 = vpow.pop %v69
    %v71 = vadd.f32 %v70, 1.0
    %v72 = vrcp.pop %v71
    %v73 = vmul.f32 %v71, %v72
    %v74 = vsub.f32 1.0, %v73
    %v75 = vmul.f32 %v72, %v74
    %v76 = vadd.f32 %v72, %v75
    %vm77 = vweird.f32 %v71
    %vm78 = vweird.f32 %v72
    %vm79 = vmor %vm77, %vm78
    %v80 = vsel %vm79, %v72, %v76
    %v81 = vand.u32 2147483647, %v71
    %vm82 = vcmp.eq.f32.partialorder %v81, 8.507059e+37
    %v83 = vand.u32 %v71, 2147483648
    %v84 = vor.u32 1.1754944e-38, %v83
    %v85 = vsel %vm82, %v84, %v80
    %v86 = vmul.f32 1.0, %v85
    %v87 = vsub.f32 1.0, %v86
    %v88 = vmul.f32 %v86, %v87
    %v89 = vmax.f32 %v66, 0.0
    %vm90 = vcmp.ne.f32.partialorder %v66, %v66
    %v91 = vadd.f32 %v66, 0.0
    %v92 = vand.u32 2147483647, %v66
    %v93 = vsub.f32 0.0, %v92
    %v94 = vmul.f32 %v93, 1.442695
    %v95 = vpow.pop %v94
    %v96 = vadd.f32 %v95, 1.0
    %v97 = vlog2.pop %v96
    %v98 = vmul.f32 %v97, 0.6931472
    %v99 = vmul.f32 -0.5, %v95
    %v100 = vadd.f32 %v99, 1.0
    %v101 = vmul.f32 %v100, %v95
    %v102 = vand.u32 2147483647, %v95
    %vm103 = vcmp.lt.f32.partialorder %v102, 0.0004427343
    %v104 = vsel %vm103, %v101, %v98
    %v105 = vadd.f32 %v89, %v104
    %v106 = vsel %vm90, %v91, %v105
    %v107 = vperm.slane %v37, 0
    %v108 = vmul.f32 %v86, %v107
    %v109 = vperm.slane %v37, 1
    %v110 = vmul.f32 %v86, %v109
    %v111 = vperm.slane %v37, 2
    %v112 = vmul.f32 %v86, %v111
    %v113 = vperm.slane %v37, 3
    %v114 = vmul.f32 %v86, %v113
    %v115 = vmul.f32 %v37, %v37
    %v116 = vperm.slane %v115, 0
    %v117 = vmul.f32 %v88, %v116
    %v118 = vrot.slane %v37, 1
    %v120 = vmul.f32 %v37, %v118
    %v121 = vperm.slane %v120, 0
    %v122 = vmul.f32 %v88, %v121
    %v123 = vrot.slane %v37, 2
    %v125 = vmul.f32 %v37, %v123
    %v126 = vperm.slane %v125, 0
    %v127 = vmul.f32 %v88, %v126
    %v128 = vrot.slane %v37, 3
    %v130 = vmul.f32 %v37, %v128
    %v131 = vperm.slane %v130, 0
    %v132 = vmul.f32 %v88, %v131
    %v133 = vperm.slane %v115, 1
    %v134 = vmul.f32 %v88, %v133
    %v135 = vperm.slane %v120, 1
    %v136 = vmul.f32 %v88, %v135
    %v137 = vperm.slane %v125, 1
    %v138 = vmul.f32 %v88, %v137
    %v139 = vperm.slane %v115, 2
    %v140 = vmul.f32 %v88, %v139
    %v141 = vperm.slane %v120, 2
    %v142 = vmul.f32 %v88, %v141
    %v143 = vperm.slane %v115, 3
    %v144 = vmul.f32 %v88, %v143
    %v145 = vld [vmem:[#allocation2] sm:$0xff]
    %v146 = vld [vmem:[#allocation2 + $0x8] sm:$0xff]
    %v147 = vld [vmem:[#allocation2 + $0x10] sm:$0xff]
    %v148 = vld [vmem:[#allocation2 + $0x18] sm:$0xff]
    %v149 = vld [vmem:[#allocation2 + $0x20] sm:$0xff]
    %v150 = vld [vmem:[#allocation2 + $0x28] sm:$0xff]
    %v151 = vld [vmem:[#allocation2 + $0x30] sm:$0xff]
    %v152 = vld [vmem:[#allocation2 + $0x38] sm:$0xff]
    %v153 = vld [vmem:[#allocation2 + $0x40] sm:$0xff]
    %v154 = vld [vmem:[#allocation2 + $0x48] sm:$0xff]
    %v155 = vld [vmem:[#allocation2 + $0x50] sm:$0xff]
    %v156 = vld [vmem:[#allocation2 + $0x58] sm:$0xff]
    %v157 = vld [vmem:[#allocation2 + $0x60] sm:$0xff]
    %v158 = vld [vmem:[#allocation2 + $0x68] sm:$0xff]
    %v159 = vld [vmem:[#allocation2 + $0x70] sm:$0xff]
    %v160 = vld [vmem:[#allocation2 + $0x78] sm:$0xff]
    %161 = vmatpush.msra.mxu0 %v160
    %162 = vmatpush.msra.mxu0 %v159
    %163 = vmatpush.msra.mxu0 %v158
    %164 = vmatpush.msra.mxu0 %v157
    %165 = vmatpush.msra.mxu0 %v156
    %166 = vmatpush.msra.mxu0 %v155
    %167 = vmatpush.msra.mxu0 %v154
    %168 = vmatpush.msra.mxu0 %v153
    %169 = vmatpush.msra.mxu0 %v152
    %170 = vmatpush.msra.mxu0 %v151
    %171 = vmatpush.msra.mxu0 %v150
    %172 = vmatpush.msra.mxu0 %v149
    %173 = vmatpush.msra.mxu0 %v148
    %174 = vmatpush.msra.mxu0 %v147
    %175 = vmatpush.msra.mxu0 %v146
    %176 = vmatpush.msra.mxu0 %v145
    %177 = vmatmul.f32.gmra.mxu0 %v106
    %v178 = vpop.f32.mrf.mxu0
    %v179 = vadd.f32 0.0, %v178
    %180 = vmatmul.f32.gmra.mxu0 %v108
    %v181 = vpop.f32.mrf.mxu0
    %v182 = vadd.f32 0.0, %v181
    %183 = vmatmul.f32.gmra.mxu0 %v110
    %v184 = vpop.f32.mrf.mxu0
    %v185 = vadd.f32 0.0, %v184
    %186 = vmatmul.f32.gmra.mxu0 %v112
    %v187 = vpop.f32.mrf.mxu0
    %v188 = vadd.f32 0.0, %v187
    %189 = vmatmul.f32.gmra.mxu0 %v114
    %v190 = vpop.f32.mrf.mxu0
    %v191 = vadd.f32 0.0, %v190
    %192 = vmatmul.f32.gmra.mxu0 %v117
    %v193 = vpop.f32.mrf.mxu0
    %v194 = vadd.f32 0.0, %v193
    %195 = vmatmul.f32.gmra.mxu0 %v122
    %v196 = vpop.f32.mrf.mxu0
    %v197 = vadd.f32 0.0, %v196
    %198 = vmatmul.f32.gmra.mxu0 %v127
    %v199 = vpop.f32.mrf.mxu0
    %v200 = vadd.f32 0.0, %v199
    %201 = vmatmul.f32.gmra.mxu0 %v132
    %v202 = vpop.f32.mrf.mxu0
    %v203 = vadd.f32 0.0, %v202
    %204 = vmatmul.f32.gmra.mxu0 %v134
    %v205 = vpop.f32.mrf.mxu0
    %v206 = vadd.f32 0.0, %v205
    %207 = vmatmul.f32.gmra.mxu0 %v136
    %v208 = vpop.f32.mrf.mxu0
    %v209 = vadd.f32 0.0, %v208
    %210 = vmatmul.f32.gmra.mxu0 %v138
    %v211 = vpop.f32.mrf.mxu0
    %v212 = vadd.f32 0.0, %v211
    %213 = vmatmul.f32.gmra.mxu0 %v140
    %v214 = vpop.f32.mrf.mxu0
    %v215 = vadd.f32 0.0, %v214
    %216 = vmatmul.f32.gmra.mxu0 %v142
    %v217 = vpop.f32.mrf.mxu0
    %v218 = vadd.f32 0.0, %v217
    %219 = vmatmul.f32.gmra.mxu0 %v144
    %v220 = vpop.f32.mrf.mxu0
    %v221 = vadd.f32 0.0, %v220
    %222 = vmatmul.f32.gmra.mxu0 0.0
    %v223 = vpop.f32.mrf.mxu0
    %224 = vdwg.mxu0
    %v225 = vld [vmem:[%s3 + $0x1] sm:$0x1]
    %v226 = vperm.slane %v225, 0
    %v227 = vadd.f32 %v179, %v226
    %v228 = vxor.u32 %v227, 2147483648
    %v229 = vmul.f32 %v228, 1.442695
    %v230 = vpow.pop %v229
    %v231 = vadd.f32 %v230, 1.0
    %v232 = vrcp.pop %v231
    %v233 = vmul.f32 %v231, %v232
    %v234 = vsub.f32 1.0, %v233
    %v235 = vmul.f32 %v232, %v234
    %v236 = vadd.f32 %v232, %v235
    %vm237 = vweird.f32 %v231
    %vm238 = vweird.f32 %v232
    %vm239 = vmor %vm237, %vm238
    %v240 = vsel %vm239, %v232, %v236
    %v241 = vand.u32 2147483647, %v231
    %vm242 = vcmp.eq.f32.partialorder %v241, 8.507059e+37
    %v243 = vand.u32 %v231, 2147483648
    %v244 = vor.u32 1.1754944e-38, %v243
    %v245 = vsel %vm242, %v244, %v240
    %v246 = vmul.f32 1.0, %v245
    %v247 = vsub.f32 1.0, %v246
    %v248 = vmul.f32 %v246, %v247
    %v249 = vmax.f32 %v227, 0.0
    %vm250 = vcmp.ne.f32.partialorder %v227, %v227
    %v251 = vadd.f32 %v227, 0.0
    %v252 = vand.u32 2147483647, %v227
    %v253 = vsub.f32 0.0, %v252
    %v254 = vmul.f32 %v253, 1.442695
    %v255 = vpow.pop %v254
    %v256 = vadd.f32 %v255, 1.0
    %v257 = vlog2.pop %v256
    %v258 = vmul.f32 %v257, 0.6931472
    %v259 = vmul.f32 -0.5, %v255
    %v260 = vadd.f32 %v259, 1.0
    %v261 = vmul.f32 %v260, %v255
    %v262 = vand.u32 2147483647, %v255
    %vm263 = vcmp.lt.f32.partialorder %v262, 0.0004427343
    %v264 = vsel %vm263, %v261, %v258
    %v265 = vadd.f32 %v249, %v264
    %v266 = vsel %vm250, %v251, %v265
    %v267 = vmul.f32 %v246, %v182
    %v268 = vmul.f32 %v246, %v185
    %v269 = vmul.f32 %v246, %v188
    %v270 = vmul.f32 %v246, %v191
    %v271 = vmul.f32 %v182, %v182
    %v272 = vmul.f32 %v248, %v271
    %v273 = vmul.f32 %v246, %v194
    %v274 = vadd.f32 %v272, %v273
    %v275 = vmul.f32 %v182, %v185
    %v276 = vmul.f32 %v248, %v275
    %v277 = vmul.f32 %v246, %v197
    %v278 = vadd.f32 %v276, %v277
    %v279 = vmul.f32 %v182, %v188
    %v280 = vmul.f32 %v248, %v279
    %v281 = vmul.f32 %v246, %v200
    %v282 = vadd.f32 %v280, %v281
    %v283 = vmul.f32 %v182, %v191
    %v284 = vmul.f32 %v248, %v283
    %v285 = vmul.f32 %v246, %v203
    %v286 = vadd.f32 %v284, %v285
    %v287 = vmul.f32 %v185, %v185
    %v288 = vmul.f32 %v248, %v287
    %v289 = vmul.f32 %v246, %v206
    %v290 = vadd.f32 %v288, %v289
    %v291 = vmul.f32 %v185, %v188
    %v292 = vmul.f32 %v248, %v291
    %v293 = vmul.f32 %v246, %v209
    %v294 = vadd.f32 %v292, %v293
    %v295 = vmul.f32 %v185, %v191
    %v296 = vmul.f32 %v248, %v295
    %v297 = vmul.f32 %v246, %v212
    %v298 = vadd.f32 %v296, %v297
    %v299 = vmul.f32 %v188, %v188
    %v300 = vmul.f32 %v248, %v299
    %v301 = vmul.f32 %v246, %v215
    %v302 = vadd.f32 %v300, %v301
    %v303 = vmul.f32 %v188, %v191
    %v304 = vmul.f32 %v248, %v303
    %v305 = vmul.f32 %v246, %v218
    %v306 = vadd.f32 %v304, %v305
    %v307 = vmul.f32 %v191, %v191
    %v308 = vmul.f32 %v248, %v307
    %v309 = vmul.f32 %v246, %v221
    %v310 = vadd.f32 %v308, %v309
    %s311 = scalar_lea.vmem [#allocation2], 128
    %v312 = vld [vmem:[%s311] sm:$0xff]
    %v313 = vld [vmem:[%s311 + $0x8] sm:$0xff]
    %v314 = vld [vmem:[%s311 + $0x10] sm:$0xff]
    %v315 = vld [vmem:[%s311 + $0x18] sm:$0xff]
    %v316 = vld [vmem:[%s311 + $0x20] sm:$0xff]
    %v317 = vld [vmem:[%s311 + $0x28] sm:$0xff]
    %v318 = vld [vmem:[%s311 + $0x30] sm:$0xff]
    %v319 = vld [vmem:[%s311 + $0x38] sm:$0xff]
    %v320 = vld [vmem:[%s311 + $0x40] sm:$0xff]
    %v321 = vld [vmem:[%s311 + $0x48] sm:$0xff]
    %v322 = vld [vmem:[%s311 + $0x50] sm:$0xff]
    %v323 = vld [vmem:[%s311 + $0x58] sm:$0xff]
    %v324 = vld [vmem:[%s311 + $0x60] sm:$0xff]
    %v325 = vld [vmem:[%s311 + $0x68] sm:$0xff]
    %v326 = vld [vmem:[%s311 + $0x70] sm:$0xff]
    %v327 = vld [vmem:[%s311 + $0x78] sm:$0xff]
    %328 = vmatpush.msra.mxu0 %v327
    %329 = vmatpush.msra.mxu0 %v326
    %330 = vmatpush.msra.mxu0 %v325
    %331 = vmatpush.msra.mxu0 %v324
    %332 = vmatpush.msra.mxu0 %v323
    %333 = vmatpush.msra.mxu0 %v322
    %334 = vmatpush.msra.mxu0 %v321
    %335 = vmatpush.msra.mxu0 %v320
    %336 = vmatpush.msra.mxu0 %v319
    %337 = vmatpush.msra.mxu0 %v318
    %338 = vmatpush.msra.mxu0 %v317
    %339 = vmatpush.msra.mxu0 %v316
    %340 = vmatpush.msra.mxu0 %v315
    %341 = vmatpush.msra.mxu0 %v314
    %342 = vmatpush.msra.mxu0 %v313
    %343 = vmatpush.msra.mxu0 %v312
    %344 = vmatmul.f32.gmra.mxu0 %v266
    %v345 = vpop.f32.mrf.mxu0
    %v346 = vadd.f32 0.0, %v345
    %347 = vmatmul.f32.gmra.mxu0 %v267
    %v348 = vpop.f32.mrf.mxu0
    %v349 = vadd.f32 0.0, %v348
    %350 = vmatmul.f32.gmra.mxu0 %v268
    %v351 = vpop.f32.mrf.mxu0
    %v352 = vadd.f32 0.0, %v351
    %353 = vmatmul.f32.gmra.mxu0 %v269
    %v354 = vpop.f32.mrf.mxu0
    %v355 = vadd.f32 0.0, %v354
    %356 = vmatmul.f32.gmra.mxu0 %v270
    %v357 = vpop.f32.mrf.mxu0
    %v358 = vadd.f32 0.0, %v357
    %359 = vmatmul.f32.gmra.mxu0 %v274
    %v360 = vpop.f32.mrf.mxu0
    %v361 = vadd.f32 0.0, %v360
    %362 = vmatmul.f32.gmra.mxu0 %v278
    %v363 = vpop.f32.mrf.mxu0
    %v364 = vadd.f32 0.0, %v363
    %365 = vmatmul.f32.gmra.mxu0 %v282
    %v366 = vpop.f32.mrf.mxu0
    %v367 = vadd.f32 0.0, %v366
    %368 = vmatmul.f32.gmra.mxu0 %v286
    %v369 = vpop.f32.mrf.mxu0
    %v370 = vadd.f32 0.0, %v369
    %371 = vmatmul.f32.gmra.mxu0 %v290
    %v372 = vpop.f32.mrf.mxu0
    %v373 = vadd.f32 0.0, %v372
    %374 = vmatmul.f32.gmra.mxu0 %v294
    %v375 = vpop.f32.mrf.mxu0
    %v376 = vadd.f32 0.0, %v375
    %377 = vmatmul.f32.gmra.mxu0 %v298
    %v378 = vpop.f32.mrf.mxu0
    %v379 = vadd.f32 0.0, %v378
    %380 = vmatmul.f32.gmra.mxu0 %v302
    %v381 = vpop.f32.mrf.mxu0
    %v382 = vadd.f32 0.0, %v381
    %383 = vmatmul.f32.gmra.mxu0 %v306
    %v384 = vpop.f32.mrf.mxu0
    %v385 = vadd.f32 0.0, %v384
    %386 = vmatmul.f32.gmra.mxu0 %v310
    %v387 = vpop.f32.mrf.mxu0
    %v388 = vadd.f32 0.0, %v387
    %389 = vmatmul.f32.gmra.mxu0 0.0
    %v390 = vpop.f32.mrf.mxu0
    %391 = vdwg.mxu0
    %v392 = vld [vmem:[%s3 + $0x2] sm:$0x1]
    %v393 = vperm.slane %v392, 0
    %v394 = vadd.f32 %v346, %v393
    %v395 = vxor.u32 %v394, 2147483648
    %v396 = vmul.f32 %v395, 1.442695
    %v397 = vpow.pop %v396
    %v398 = vadd.f32 %v397, 1.0
    %v399 = vrcp.pop %v398
    %v400 = vmul.f32 %v398, %v399
    %v401 = vsub.f32 1.0, %v400
    %v402 = vmul.f32 %v399, %v401
    %v403 = vadd.f32 %v399, %v402
    %vm404 = vweird.f32 %v398
    %vm405 = vweird.f32 %v399
    %vm406 = vmor %vm404, %vm405
    %v407 = vsel %vm406, %v399, %v403
    %v408 = vand.u32 2147483647, %v398
    %vm409 = vcmp.eq.f32.partialorder %v408, 8.507059e+37
    %v410 = vand.u32 %v398, 2147483648
    %v411 = vor.u32 1.1754944e-38, %v410
    %v412 = vsel %vm409, %v411, %v407
    %v413 = vmul.f32 1.0, %v412
    %v414 = vsub.f32 1.0, %v413
    %v415 = vmul.f32 %v413, %v414
    %v416 = vmax.f32 %v394, 0.0
    %vm417 = vcmp.ne.f32.partialorder %v394, %v394
    %v418 = vadd.f32 %v394, 0.0
    %v419 = vand.u32 2147483647, %v394
    %v420 = vsub.f32 0.0, %v419
    %v421 = vmul.f32 %v420, 1.442695
    %v422 = vpow.pop %v421
    %v423 = vadd.f32 %v422, 1.0
    %v424 = vlog2.pop %v423
    %v425 = vmul.f32 %v424, 0.6931472
    %v426 = vmul.f32 -0.5, %v422
    %v427 = vadd.f32 %v426, 1.0
    %v428 = vmul.f32 %v427, %v422
    %v429 = vand.u32 2147483647, %v422
    %vm430 = vcmp.lt.f32.partialorder %v429, 0.0004427343
    %v431 = vsel %vm430, %v428, %v425
    %v432 = vadd.f32 %v416, %v431
    %v433 = vsel %vm417, %v418, %v432
    %v434 = vmul.f32 %v413, %v349
    %v435 = vmul.f32 %v413, %v352
    %v436 = vmul.f32 %v413, %v355
    %v437 = vmul.f32 %v413, %v358
    %v438 = vmul.f32 %v349, %v349
    %v439 = vmul.f32 %v415, %v438
    %v440 = vmul.f32 %v413, %v361
    %v441 = vadd.f32 %v439, %v440
    %v442 = vmul.f32 %v349, %v352
    %v443 = vmul.f32 %v415, %v442
    %v444 = vmul.f32 %v413, %v364
    %v445 = vadd.f32 %v443, %v444
    %v446 = vmul.f32 %v349, %v355
    %v447 = vmul.f32 %v415, %v446
    %v448 = vmul.f32 %v413, %v367
    %v449 = vadd.f32 %v447, %v448
    %v450 = vmul.f32 %v349, %v358
    %v451 = vmul.f32 %v415, %v450
    %v452 = vmul.f32 %v413, %v370
    %v453 = vadd.f32 %v451, %v452
    %v454 = vmul.f32 %v352, %v352
    %v455 = vmul.f32 %v415, %v454
    %v456 = vmul.f32 %v413, %v373
    %v457 = vadd.f32 %v455, %v456
    %v458 = vmul.f32 %v352, %v355
    %v459 = vmul.f32 %v415, %v458
    %v460 = vmul.f32 %v413, %v376
    %v461 = vadd.f32 %v459, %v460
    %v462 = vmul.f32 %v352, %v358
    %v463 = vmul.f32 %v415, %v462
    %v464 = vmul.f32 %v413, %v379
    %v465 = vadd.f32 %v463, %v464
    %v466 = vmul.f32 %v355, %v355
    %v467 = vmul.f32 %v415, %v466
    %v468 = vmul.f32 %v413, %v382
    %v469 = vadd.f32 %v467, %v468
    %v470 = vmul.f32 %v355, %v358
    %v471 = vmul.f32 %v415, %v470
    %v472 = vmul.f32 %v413, %v385
    %v473 = vadd.f32 %v471, %v472
    %v474 = vmul.f32 %v358, %v358
    %v475 = vmul.f32 %v415, %v474
    %v476 = vmul.f32 %v413, %v388
    %v477 = vadd.f32 %v475, %v476
    %s478 = scalar_lea.vmem [#allocation2], 256
    %v479 = vld [vmem:[%s478] sm:$0xff]
    %v480 = vld [vmem:[%s478 + $0x8] sm:$0xff]
    %v481 = vld [vmem:[%s478 + $0x10] sm:$0xff]
    %v482 = vld [vmem:[%s478 + $0x18] sm:$0xff]
    %v483 = vld [vmem:[%s478 + $0x20] sm:$0xff]
    %v484 = vld [vmem:[%s478 + $0x28] sm:$0xff]
    %v485 = vld [vmem:[%s478 + $0x30] sm:$0xff]
    %v486 = vld [vmem:[%s478 + $0x38] sm:$0xff]
    %v487 = vld [vmem:[%s478 + $0x40] sm:$0xff]
    %v488 = vld [vmem:[%s478 + $0x48] sm:$0xff]
    %v489 = vld [vmem:[%s478 + $0x50] sm:$0xff]
    %v490 = vld [vmem:[%s478 + $0x58] sm:$0xff]
    %v491 = vld [vmem:[%s478 + $0x60] sm:$0xff]
    %v492 = vld [vmem:[%s478 + $0x68] sm:$0xff]
    %v493 = vld [vmem:[%s478 + $0x70] sm:$0xff]
    %v494 = vld [vmem:[%s478 + $0x78] sm:$0xff]
    %495 = vmatpush.msra.mxu0 %v494
    %496 = vmatpush.msra.mxu0 %v493
    %497 = vmatpush.msra.mxu0 %v492
    %498 = vmatpush.msra.mxu0 %v491
    %499 = vmatpush.msra.mxu0 %v490
    %500 = vmatpush.msra.mxu0 %v489
    %501 = vmatpush.msra.mxu0 %v488
    %502 = vmatpush.msra.mxu0 %v487
    %503 = vmatpush.msra.mxu0 %v486
    %504 = vmatpush.msra.mxu0 %v485
    %505 = vmatpush.msra.mxu0 %v484
    %506 = vmatpush.msra.mxu0 %v483
    %507 = vmatpush.msra.mxu0 %v482
    %508 = vmatpush.msra.mxu0 %v481
    %509 = vmatpush.msra.mxu0 %v480
    %510 = vmatpush.msra.mxu0 %v479
    %511 = vmatmul.f32.gmra.mxu0 %v433
    %v512 = vpop.f32.mrf.mxu0
    %v513 = vadd.f32 0.0, %v512
    %514 = vmatmul.f32.gmra.mxu0 %v434
    %v515 = vpop.f32.mrf.mxu0
    %v516 = vadd.f32 0.0, %v515
    %517 = vmatmul.f32.gmra.mxu0 %v435
    %v518 = vpop.f32.mrf.mxu0
    %v519 = vadd.f32 0.0, %v518
    %520 = vmatmul.f32.gmra.mxu0 %v436
    %v521 = vpop.f32.mrf.mxu0
    %v522 = vadd.f32 0.0, %v521
    %523 = vmatmul.f32.gmra.mxu0 %v437
    %v524 = vpop.f32.mrf.mxu0
    %v525 = vadd.f32 0.0, %v524
    %526 = vmatmul.f32.gmra.mxu0 %v441
    %v527 = vpop.f32.mrf.mxu0
    %v528 = vadd.f32 0.0, %v527
    %529 = vmatmul.f32.gmra.mxu0 %v445
    %v530 = vpop.f32.mrf.mxu0
    %v531 = vadd.f32 0.0, %v530
    %532 = vmatmul.f32.gmra.mxu0 %v449
    %v533 = vpop.f32.mrf.mxu0
    %v534 = vadd.f32 0.0, %v533
    %535 = vmatmul.f32.gmra.mxu0 %v453
    %v536 = vpop.f32.mrf.mxu0
    %v537 = vadd.f32 0.0, %v536
    %538 = vmatmul.f32.gmra.mxu0 %v457
    %v539 = vpop.f32.mrf.mxu0
    %v540 = vadd.f32 0.0, %v539
    %541 = vmatmul.f32.gmra.mxu0 %v461
    %v542 = vpop.f32.mrf.mxu0
    %v543 = vadd.f32 0.0, %v542
    %544 = vmatmul.f32.gmra.mxu0 %v465
    %v545 = vpop.f32.mrf.mxu0
    %v546 = vadd.f32 0.0, %v545
    %547 = vmatmul.f32.gmra.mxu0 %v469
    %v548 = vpop.f32.mrf.mxu0
    %v549 = vadd.f32 0.0, %v548
    %550 = vmatmul.f32.gmra.mxu0 %v473
    %v551 = vpop.f32.mrf.mxu0
    %v552 = vadd.f32 0.0, %v551
    %553 = vmatmul.f32.gmra.mxu0 %v477
    %v554 = vpop.f32.mrf.mxu0
    %v555 = vadd.f32 0.0, %v554
    %556 = vmatmul.f32.gmra.mxu0 0.0
    %v557 = vpop.f32.mrf.mxu0
    %558 = vdwg.mxu0
    %v559 = vld [vmem:[%s3 + $0x3] sm:$0x1]
    %v560 = vperm.slane %v559, 0
    %v561 = vadd.f32 %v513, %v560
    %v562 = vxor.u32 %v561, 2147483648
    %v563 = vmul.f32 %v562, 1.442695
    %v564 = vpow.pop %v563
    %v565 = vadd.f32 %v564, 1.0
    %v566 = vrcp.pop %v565
    %v567 = vmul.f32 %v565, %v566
    %v568 = vsub.f32 1.0, %v567
    %v569 = vmul.f32 %v566, %v568
    %v570 = vadd.f32 %v566, %v569
    %vm571 = vweird.f32 %v565
    %vm572 = vweird.f32 %v566
    %vm573 = vmor %vm571, %vm572
    %v574 = vsel %vm573, %v566, %v570
    %v575 = vand.u32 2147483647, %v565
    %vm576 = vcmp.eq.f32.partialorder %v575, 8.507059e+37
    %v577 = vand.u32 %v565, 2147483648
    %v578 = vor.u32 1.1754944e-38, %v577
    %v579 = vsel %vm576, %v578, %v574
    %v580 = vmul.f32 1.0, %v579
    %v581 = vsub.f32 1.0, %v580
    %v582 = vmul.f32 %v580, %v581
    %v583 = vmax.f32 %v561, 0.0
    %vm584 = vcmp.ne.f32.partialorder %v561, %v561
    %v585 = vadd.f32 %v561, 0.0
    %v586 = vand.u32 2147483647, %v561
    %v587 = vsub.f32 0.0, %v586
    %v588 = vmul.f32 %v587, 1.442695
    %v589 = vpow.pop %v588
    %v590 = vadd.f32 %v589, 1.0
    %v591 = vlog2.pop %v590
    %v592 = vmul.f32 %v591, 0.6931472
    %v593 = vmul.f32 -0.5, %v589
    %v594 = vadd.f32 %v593, 1.0
    %v595 = vmul.f32 %v594, %v589
    %v596 = vand.u32 2147483647, %v589
    %vm597 = vcmp.lt.f32.partialorder %v596, 0.0004427343
    %v598 = vsel %vm597, %v595, %v592
    %v599 = vadd.f32 %v583, %v598
    %v600 = vsel %vm584, %v585, %v599
    %v601 = vmul.f32 %v580, %v516
    %v602 = vmul.f32 %v580, %v519
    %v603 = vmul.f32 %v580, %v522
    %v604 = vmul.f32 %v580, %v525
    %v605 = vmul.f32 %v516, %v516
    %v606 = vmul.f32 %v582, %v605
    %v607 = vmul.f32 %v580, %v528
    %v608 = vadd.f32 %v606, %v607
    %v609 = vmul.f32 %v516, %v519
    %v610 = vmul.f32 %v582, %v609
    %v611 = vmul.f32 %v580, %v531
    %v612 = vadd.f32 %v610, %v611
    %v613 = vmul.f32 %v516, %v522
    %v614 = vmul.f32 %v582, %v613
    %v615 = vmul.f32 %v580, %v534
    %v616 = vadd.f32 %v614, %v615
    %v617 = vmul.f32 %v516, %v525
    %v618 = vmul.f32 %v582, %v617
    %v619 = vmul.f32 %v580, %v537
    %v620 = vadd.f32 %v618, %v619
    %v621 = vmul.f32 %v519, %v519
    %v622 = vmul.f32 %v582, %v621
    %v623 = vmul.f32 %v580, %v540
    %v624 = vadd.f32 %v622, %v623
    %v625 = vmul.f32 %v519, %v522
    %v626 = vmul.f32 %v582, %v625
    %v627 = vmul.f32 %v580, %v543
    %v628 = vadd.f32 %v626, %v627
    %v629 = vmul.f32 %v519, %v525
    %v630 = vmul.f32 %v582, %v629
    %v631 = vmul.f32 %v580, %v546
    %v632 = vadd.f32 %v630, %v631
    %v633 = vmul.f32 %v522, %v522
    %v634 = vmul.f32 %v582, %v633
    %v635 = vmul.f32 %v580, %v549
    %v636 = vadd.f32 %v634, %v635
    %v637 = vmul.f32 %v522, %v525
    %v638 = vmul.f32 %v582, %v637
    %v639 = vmul.f32 %v580, %v552
    %v640 = vadd.f32 %v638, %v639
    %v641 = vmul.f32 %v525, %v525
    %v642 = vmul.f32 %v582, %v641
    %v643 = vmul.f32 %v580, %v555
    %v644 = vadd.f32 %v642, %v643
    %v645 = vld [vmem:[%s4] sm:$0x1]
    %v647 = vperm.slane %v645, 0
    %v649 = vmul.f32 %v600, %v647
    %v650 = vmul.f32 %v601, %v647
    %v651 = vmul.f32 %v602, %v647
    %v652 = vmul.f32 %v603, %v647
    %v653 = vmul.f32 %v604, %v647
    %v654 = vmul.f32 %v608, %v647
    %v655 = vmul.f32 %v612, %v647
    %v656 = vmul.f32 %v616, %v647
    %v657 = vmul.f32 %v620, %v647
    %v658 = vmul.f32 %v624, %v647
    %v659 = vmul.f32 %v628, %v647
    %v660 = vmul.f32 %v632, %v647
    %v661 = vmul.f32 %v636, %v647
    %v662 = vmul.f32 %v640, %v647
    %v663 = vmul.f32 %v644, %v647
    %v664 = vmul.f32 %v647, 0.0
    %665 = vadd.xlane.f32.xlu0 %v649
    %v666 = vpop.xlane.xlu0 %665
    %667 = vadd.xlane.f32.xlu0 %v650
    %v668 = vpop.xlane.xlu0 %667
    %669 = vadd.xlane.f32.xlu0 %v651
    %v670 = vpop.xlane.xlu0 %669
    %671 = vadd.xlane.f32.xlu0 %v652
    %v672 = vpop.xlane.xlu0 %671
    %673 = vadd.xlane.f32.xlu0 %v653
    %v674 = vpop.xlane.xlu0 %673
    %675 = vadd.xlane.f32.xlu0 %v654
    %v676 = vpop.xlane.xlu0 %675
    %677 = vadd.xlane.f32.xlu0 %v655
    %v678 = vpop.xlane.xlu0 %677
    %679 = vadd.xlane.f32.xlu0 %v656
    %v680 = vpop.xlane.xlu0 %679
    %681 = vadd.xlane.f32.xlu0 %v657
    %v682 = vpop.xlane.xlu0 %681
    %683 = vadd.xlane.f32.xlu0 %v658
    %v684 = vpop.xlane.xlu0 %683
    %685 = vadd.xlane.f32.xlu0 %v659
    %v686 = vpop.xlane.xlu0 %685
    %687 = vadd.xlane.f32.xlu0 %v660
    %v688 = vpop.xlane.xlu0 %687
    %689 = vadd.xlane.f32.xlu0 %v661
    %v690 = vpop.xlane.xlu0 %689
    %691 = vadd.xlane.f32.xlu0 %v662
    %v692 = vpop.xlane.xlu0 %691
    %693 = vadd.xlane.f32.xlu0 %v663
    %v694 = vpop.xlane.xlu0 %693
    %695 = vadd.xlane.f32.xlu0 %v664
    %v696 = vpop.xlane.xlu0 %695
    %vm697 = vcmask 7168
    %698 = vst.msk [vmem:[%s5] sm:$0xff] %vm697, %v666
    %699 = vst.msk [vmem:[%s5 + $0x8] sm:$0xff] %vm697, %v668
    %700 = vst.msk [vmem:[%s5 + $0x10] sm:$0xff] %vm697, %v670
    %701 = vst.msk [vmem:[%s5 + $0x18] sm:$0xff] %vm697, %v672
    %702 = vst.msk [vmem:[%s5 + $0x20] sm:$0xff] %vm697, %v674
    %703 = vst.msk [vmem:[%s5 + $0x28] sm:$0xff] %vm697, %v676
    %704 = vst.msk [vmem:[%s5 + $0x30] sm:$0xff] %vm697, %v678
    %705 = vst.msk [vmem:[%s5 + $0x38] sm:$0xff] %vm697, %v680
    %706 = vst.msk [vmem:[%s5 + $0x40] sm:$0xff] %vm697, %v682
    %707 = vst.msk [vmem:[%s5 + $0x48] sm:$0xff] %vm697, %v684
    %708 = vst.msk [vmem:[%s5 + $0x50] sm:$0xff] %vm697, %v686
    %709 = vst.msk [vmem:[%s5 + $0x58] sm:$0xff] %vm697, %v688
    %710 = vst.msk [vmem:[%s5 + $0x60] sm:$0xff] %vm697, %v690
    %711 = vst.msk [vmem:[%s5 + $0x68] sm:$0xff] %vm697, %v692
    %712 = vst.msk [vmem:[%s5 + $0x70] sm:$0xff] %vm697, %v694
    %713 = vst.msk [vmem:[%s5 + $0x78] sm:$0xff] %vm697, %v696
    // Predicated region
    $region26: #{lnn_forward.1} parent=1 // pred_check
      _
    $region27: #{lnn_forward.1} parent=1 // pred_check_branch
      %715 = sbr.rel (0) target = $region29
    $region28: #{lnn_forward.1} parent=1 // pred_region
      _
    $region29: #{lnn_forward.1} parent=1 // pred_fallthru
      _
    // Predicated region
    $region30: #{lnn_forward.1} parent=1 // pred_check
      _
    $region31: #{lnn_forward.1} parent=1 // pred_check_branch
      %717 = sbr.rel (0) target = $region33
    $region32: #{lnn_forward.1} parent=1 // pred_region
      _
    $region33: #{lnn_forward.1} parent=1 // pred_fallthru
      _
    %718 = vsyncpa [#allocation3], 1

</llo_original>
